<compile_context>
chip_gen: v7x
topology: tpu7x:2x2x1
jax: 0.10.0
libtpu: 0.0.40
codegen_flags: <defaults>
</compile_context>

<pallas_src>
import functools
import math

import jax
import jax.numpy as jnp
from jax.experimental import pallas as pl
from jax.experimental.pallas import tpu as pltpu


# ----------------------------------------------------------------------------
# Fused encoder kernel (one image per grid step)
# ----------------------------------------------------------------------------
def _encoder_kernel(x1_ref, w1_ref, b1_ref, w2_ref, b2_ref, w3_ref, b3_ref,
                    rw1_ref, rw2_ref, o_ref, s1_ref, s2_ref, col_ref, *, q):
    """q = final spatial size (H/4).  All refs live in VMEM.

    x1_ref : (1, 4*q*q, 16*cin)  parity-class-ordered im2col of the padded input
    w1_ref : (16*cin, nh2) bf16      b1_ref: (1, nh2) f32
    w2_ref : (16*nh2, nh)  bf16      b2_ref: (1, nh)  f32   (space-to-depth layout)
    w3_ref : (9*nh, nh)    bf16      b3_ref: (1, nh)  f32
    rw1_ref: (L, 9*nh, r)  bf16      rw2_ref: (L, r, nh) bf16
    o_ref  : (1, q*q, nh)  f32
    s1_ref : (q+1, q+1, 4*nh2) f32   padded space-to-depth of relu(conv_1)
    s2_ref : (q+2, q+2, nh)    f32   padded (q x q) feature map
    col_ref: (q*q, 9*nh)       f32   im2col staging buffer
    """
    f32, bf16 = jnp.float32, jnp.bfloat16
    nh2 = w1_ref.shape[1]            # num_hiddens // 2
    nh = w3_ref.shape[1]             # num_hiddens
    nres = rw1_ref.shape[0]
    m = q * q                        # pixels of the final q x q map

    # ---- conv_1 (4x4, stride 2, pad 1) + ReLU : one MXU matmul -------------
    y1 = jnp.dot(x1_ref[0], w1_ref[...], preferred_element_type=f32)
    y1 = jnp.maximum(y1 + b1_ref[...], 0.0)                   # (4m, nh2) f32

    # ---- scatter conv_1 output into padded space-to-depth scratch ----------
    # S1[bi, bj, nh2*(2*si+sj)+c] == pad(relu(conv1))[2*bi+si, 2*bj+sj, c]
    s1_ref[...] = jnp.zeros_like(s1_ref)
    for cls, (bi0, bj0) in enumerate(((1, 1), (1, 0), (0, 1), (0, 0))):
        g = cls * nh2
        for rr in range(q):
            row = cls * m + rr * q
            s1_ref[bi0 + rr, bj0:bj0 + q, g:g + nh2] = y1[row:row + q, :]

    # ---- conv_2 (4x4, stride 2, pad 1) + ReLU -------------------------------
    # == stride-1 2x2 conv on S1: contiguous in-VMEM im2col, one K=16*nh2 dot.
    k2 = 4 * nh2
    for t, (ti, tj) in enumerate(((0, 0), (0, 1), (1, 0), (1, 1))):
        col_ref[:, t * k2:(t + 1) * k2] = (
            s1_ref[ti:ti + q, tj:tj + q, :].reshape(m, k2))
    y = jnp.dot(col_ref[:, 0:4 * k2].astype(bf16), w2_ref[...],
                preferred_element_type=f32)
    y = jnp.maximum(y + b2_ref[...], 0.0)                      # (m, nh) f32

    # ---- helpers for the 3x3 / stride-1 / pad-1 convs on the q x q map ------
    def write_padded(val):                       # val: (m, nh) f32
        for rr in range(q):
            s2_ref[1 + rr, 1:1 + q, :] = val[rr * q:(rr + 1) * q, :]

    def conv3x3(w_flat):                         # -> (m, w_flat.shape[1]) f32
        for k, (ki, kj) in enumerate([(a, b) for a in range(3)
                                      for b in range(3)]):
            col_ref[:, k * nh:(k + 1) * nh] = (
                s2_ref[ki:ki + q, kj:kj + q, :].reshape(m, nh))
        return jnp.dot(col_ref[...].astype(bf16), w_flat,
                       preferred_element_type=f32)

    s2_ref[...] = jnp.zeros_like(s2_ref)         # border stays zero throughout

    # ---- conv_3 (3x3, stride 1, pad 1), no activation -----------------------
    write_padded(y)
    y = conv3x3(w3_ref[...]) + b3_ref[...]

    # ---- residual stack: x + conv1x1(relu(conv3x3(relu(x)))) , final ReLU ---
    for l in range(nres):
        write_padded(jnp.maximum(y, 0.0))
        h = jnp.maximum(conv3x3(rw1_ref[l]), 0.0)              # (m, r)
        y = y + jnp.dot(h.astype(bf16), rw2_ref[l],
                        preferred_element_type=f32)
    o_ref[0] = jnp.maximum(y, 0.0).astype(o_ref.dtype)


# ----------------------------------------------------------------------------
# One-time host-side preparation (hoisted out of the hot forward path)
# ----------------------------------------------------------------------------
def prepare_encoder_params(params, compute_dtype=jnp.bfloat16):
    """Repack PyTorch-layout weights into flat (K, Cout) MXU slabs, once."""
    w1, b1 = params['w1'], params['b1']          # (nh2, cin, 4, 4)
    w2, b2 = params['w2'], params['b2']          # (nh,  nh2, 4, 4)
    w3, b3 = params['w3'], params['b3']          # (nh,  nh,  3, 3)
    nh2, cin = w1.shape[0], w1.shape[1]
    nh = w2.shape[0]

    w1f = jnp.transpose(w1, (2, 3, 1, 0)).reshape(16 * cin, nh2)
    # conv_2 weights re-laid-out for the 2x2-tap space-to-depth formulation:
    # row = 4*nh2*(2*ti+tj) + nh2*(2*si+sj) + c  with ki=2*ti+si, kj=2*tj+sj.
    w2r = w2.reshape(nh, nh2, 2, 2, 2, 2)        # (co, c, ti, si, tj, sj)
    w2f = jnp.transpose(w2r, (2, 4, 3, 5, 1, 0)).reshape(16 * nh2, nh)
    w3f = jnp.transpose(w3, (2, 3, 1, 0)).reshape(9 * nh, nh)
    rw1f = jnp.stack([jnp.transpose(r1, (2, 3, 1, 0)).reshape(9 * nh,
                                                              r1.shape[0])
                      for r1, _ in params['res']])
    rw2f = jnp.stack([jnp.transpose(r2[:, :, 0, 0], (1, 0))
                      for _, r2 in params['res']])
    return dict(
        w1f=w1f.astype(compute_dtype), b1=b1.reshape(1, -1).astype(jnp.float32),
        w2f=w2f.astype(compute_dtype), b2=b2.reshape(1, -1).astype(jnp.float32),
        w3f=w3f.astype(compute_dtype), b3=b3.reshape(1, -1).astype(jnp.float32),
        rw1f=rw1f.astype(compute_dtype), rw2f=rw2f.astype(compute_dtype))


def _conv1_class_im2col(x_nchw):
    """Parity-class-grouped im2col of the padded input for conv_1.

    Rows are ordered by the 2x2 parity class conv_2's space-to-depth scratch
    needs, so every in-kernel access downstream is a contiguous slice.
    Only touches the raw (tiny) input once.
    """
    n, cin, hh, _ = x_nchw.shape
    q = hh // 4
    x = jnp.transpose(x_nchw, (0, 2, 3, 1))                    # NHWC
    xp = jnp.pad(x, ((0, 0), (1, 1), (1, 1), (0, 0)))
    chunks = []
    for si in (0, 1):
        for sj in (0, 1):
            r0, c0 = 2 * (1 - si), 2 * (1 - sj)
            sub = xp[:, r0:r0 + 4 * q, c0:c0 + 4 * q, :]
            sub = sub.reshape(n, q, 4, q, 4, cin).transpose(0, 1, 3, 2, 4, 5)
            chunks.append(sub.reshape(n, q * q, 16 * cin))
    return jnp.concatenate(chunks, axis=1)                     # (N, 4q^2, 16cin)


# ----------------------------------------------------------------------------
# Encoder forward (single fused pallas_call)
# ----------------------------------------------------------------------------
@jax.jit
def encoder_forward(prep, x_nchw):
    n, cin, hh, ww = x_nchw.shape
    assert hh == ww and hh % 4 == 0
    q = hh // 4
    m = q * q
    nh2 = prep['w1f'].shape[1]
    nh = prep['w3f'].shape[1]
    r = prep['rw2f'].shape[1]
    nres = prep['rw1f'].shape[0]

    x1 = _conv1_class_im2col(x_nchw).astype(prep['w1f'].dtype)  # (N, 4m, 16cin)

    kernel = functools.partial(_encoder_kernel, q=q)
    out = pl.pallas_call(
        kernel,
        out_shape=jax.ShapeDtypeStruct((n, m, nh), jnp.float32),
        grid=(n,),
        in_specs=[
            pl.BlockSpec((1, 4 * m, 16 * cin), lambda i: (i, 0, 0)),
            pl.BlockSpec((16 * cin, nh2), lambda i: (0, 0)),
            pl.BlockSpec((1, nh2), lambda i: (0, 0)),
            pl.BlockSpec((16 * nh2, nh), lambda i: (0, 0)),
            pl.BlockSpec((1, nh), lambda i: (0, 0)),
            pl.BlockSpec((9 * nh, nh), lambda i: (0, 0)),
            pl.BlockSpec((1, nh), lambda i: (0, 0)),
            pl.BlockSpec((nres, 9 * nh, r), lambda i: (0, 0, 0)),
            pl.BlockSpec((nres, r, nh), lambda i: (0, 0, 0)),
        ],
        out_specs=pl.BlockSpec((1, m, nh), lambda i: (i, 0, 0)),
        scratch_shapes=[
            pltpu.VMEM((q + 1, q + 1, 4 * nh2), jnp.float32),   # s2d conv_1 out
            pltpu.VMEM((q + 2, q + 2, nh), jnp.float32),        # padded q x q map
            pltpu.VMEM((m, 9 * nh), jnp.float32),               # im2col staging
        ],
        compiler_params=pltpu.CompilerParams(
            dimension_semantics=("parallel",)),
    )(x1, prep['w1f'], prep['b1'], prep['w2f'], prep['b2'],
      prep['w3f'], prep['b3'], prep['rw1f'], prep['rw2f'])

    out = out.reshape(n, q, q, nh)
    return jnp.transpose(out, (0, 3, 1, 2))                    # -> NCHW


# ----------------------------------------------------------------------------
# Parameter init (PyTorch-style uniform(-1/sqrt(fan_in), +1/sqrt(fan_in)))
# ----------------------------------------------------------------------------
def conv_params(key, cout, cin, kh, kw, use_bias=True):
    fan_in = cin * kh * kw
    bound = 1.0 / math.sqrt(fan_in)
    kw_, kb_ = jax.random.split(key)
    w = jax.random.uniform(kw_, (cout, cin, kh, kw), jnp.float32, -bound, bound)
    b = (jax.random.uniform(kb_, (cout,), jnp.float32, -bound, bound)
         if use_bias else None)
    return w, b


def init_encoder_params(key, in_channels, num_hiddens, num_residual_layers,
                        num_residual_hiddens):
    keys = jax.random.split(key, 3 + 2 * num_residual_layers)
    w1, b1 = conv_params(keys[0], num_hiddens // 2, in_channels, 4, 4)
    w2, b2 = conv_params(keys[1], num_hiddens, num_hiddens // 2, 4, 4)
    w3, b3 = conv_params(keys[2], num_hiddens, num_hiddens, 3, 3)
    res = []
    for li in range(num_residual_layers):
        rw1, _ = conv_params(keys[3 + 2 * li], num_residual_hiddens,
                             num_hiddens, 3, 3, use_bias=False)
        rw2, _ = conv_params(keys[4 + 2 * li], num_hiddens,
                             num_residual_hiddens, 1, 1, use_bias=False)
        res.append((rw1, rw2))
    return dict(w1=w1, b1=b1, w2=w2, b2=b2, w3=w3, b3=b3, res=res)


# ----------------------------------------------------------------------------
# Pure-JAX reference (lax.conv, f32 HIGHEST) for the correctness check
# ----------------------------------------------------------------------------
def _ref_conv(x, w, b, stride, pad):
    y = jax.lax.conv_general_dilated(
        x, w, (stride, stride), [(pad, pad), (pad, pad)],
        dimension_numbers=('NCHW', 'OIHW', 'NCHW'),
        precision=jax.lax.Precision.HIGHEST)
    if b is not None:
        y = y + b[None, :, None, None]
    return y


def ref_encoder(params, x):
    y = jax.nn.relu(_ref_conv(x, params['w1'], params['b1'], 2, 1))
    y = jax.nn.relu(_ref_conv(y, params['w2'], params['b2'], 2, 1))
    y = _ref_conv(y, params['w3'], params['b3'], 1, 1)
    for rw1, rw2 in params['res']:
        h = _ref_conv(jax.nn.relu(y), rw1, None, 1, 1)
        h = _ref_conv(jax.nn.relu(h), rw2, None, 1, 0)
        y = y + h
    return jax.nn.relu(y)


if __name__ == "__main__":
    # Small shapes consistent with the module: Encoder(in_channels=4,
    # num_hiddens=32, num_residual_layers=2, num_residual_hiddens=8).
    in_channels, num_hiddens = 4, 32
    num_residual_layers, num_residual_hiddens = 2, 8

    key = jax.random.PRNGKey(0)
    k_param, k_x = jax.random.split(key)
    params = init_encoder_params(k_param, in_channels, num_hiddens,
                                 num_residual_layers, num_residual_hiddens)
    prep = prepare_encoder_params(params)          # one-time weight repack
    x = jax.random.normal(k_x, (2, 4, 16, 16), jnp.float32)    # NCHW

    out = jax.block_until_ready(encoder_forward(prep, x))
    ref = jax.block_until_ready(ref_encoder(params, x))

    assert out.shape == ref.shape == (2, num_hiddens, 4, 4), out.shape
    # Kernel feeds the MXU bf16 operands (f32 accumulation), so compare
    # against the f32-HIGHEST reference at bf16-level tolerance.
    err = float(jnp.max(jnp.abs(out - ref)))
    assert jnp.allclose(out, ref, atol=2e-2, rtol=2e-2), err

    print("KERNEL_OK")
</pallas_src>

<mosaic_0001>
module attributes {stable_mosaic.version = 11 : i64} {
  func.func @_encoder_kernel(%arg0: i32, %arg1: memref<1x64x64xbf16, #tpu.memory_space<vmem>>, %arg2: memref<64x16xbf16, #tpu.memory_space<vmem>>, %arg3: memref<1x16xf32, #tpu.memory_space<vmem>>, %arg4: memref<256x32xbf16, #tpu.memory_space<vmem>>, %arg5: memref<1x32xf32, #tpu.memory_space<vmem>>, %arg6: memref<288x32xbf16, #tpu.memory_space<vmem>>, %arg7: memref<1x32xf32, #tpu.memory_space<vmem>>, %arg8: memref<2x288x8xbf16, #tpu.memory_space<vmem>>, %arg9: memref<2x8x32xbf16, #tpu.memory_space<vmem>>, %arg10: memref<1x16x32xf32, #tpu.memory_space<vmem>>, %arg11: memref<5x5x64xf32, #tpu.memory_space<vmem>>, %arg12: memref<6x6x32xf32, #tpu.memory_space<vmem>>, %arg13: memref<16x288xf32, #tpu.memory_space<vmem>>) attributes {dimension_semantics = [#tpu.dimension_semantics<parallel>], iteration_bounds = array<i64: 2>, scalar_prefetch = 0 : i64, scratch_operands = 3 : i64, tpu.core_type = #tpu.core_type<tc>, window_params = [{transform_indices = @transform_0, window_bounds = array<i64: 1, 64, 64>}, {pipeline_mode = #tpu.pipeline_mode<synchronous>, transform_indices = @transform_1, window_bounds = array<i64: 64, 16>}, {pipeline_mode = #tpu.pipeline_mode<synchronous>, transform_indices = @transform_2, window_bounds = array<i64: 1, 16>}, {pipeline_mode = #tpu.pipeline_mode<synchronous>, transform_indices = @transform_3, window_bounds = array<i64: 256, 32>}, {pipeline_mode = #tpu.pipeline_mode<synchronous>, transform_indices = @transform_4, window_bounds = array<i64: 1, 32>}, {pipeline_mode = #tpu.pipeline_mode<synchronous>, transform_indices = @transform_5, window_bounds = array<i64: 288, 32>}, {pipeline_mode = #tpu.pipeline_mode<synchronous>, transform_indices = @transform_6, window_bounds = array<i64: 1, 32>}, {pipeline_mode = #tpu.pipeline_mode<synchronous>, transform_indices = @transform_7, window_bounds = array<i64: 2, 288, 8>}, {pipeline_mode = #tpu.pipeline_mode<synchronous>, transform_indices = @transform_8, window_bounds = array<i64: 2, 8, 32>}, {transform_indices = @transform_9, window_bounds = array<i64: 1, 16, 32>}]} {
    %c0 = arith.constant 0 : index
    %c0_0 = arith.constant 0 : index
    %c0_1 = arith.constant 0 : index
    %0 = vector.load %arg1[%c0, %c0_0, %c0_1] : memref<1x64x64xbf16, #tpu.memory_space<vmem>>, vector<1x64x64xbf16>
    %1 = vector.shape_cast %0 : vector<1x64x64xbf16> to vector<64x64xbf16>
    %c0_2 = arith.constant 0 : index
    %c0_3 = arith.constant 0 : index
    %2 = vector.load %arg2[%c0_2, %c0_3] : memref<64x16xbf16, #tpu.memory_space<vmem>>, vector<64x16xbf16>
    %cst = arith.constant dense<0.000000e+00> : vector<64x16xf32>
    %3 = tpu.matmul %1, %2, %cst {dimension_numbers = #tpu.dot_dimension_numbers<[1], [0], [0], [1], [0, 0, 1, 1], [], []>} : vector<64x64xbf16>, vector<64x16xbf16>, vector<64x16xf32> -> vector<64x16xf32>
    %c0_4 = arith.constant 0 : index
    %c0_5 = arith.constant 0 : index
    %4 = vector.load %arg3[%c0_4, %c0_5] : memref<1x16xf32, #tpu.memory_space<vmem>>, vector<1x16xf32>
    %5 = vector.broadcast %4 : vector<1x16xf32> to vector<64x16xf32>
    %6 = arith.addf %3, %5 : vector<64x16xf32>
    %cst_6 = arith.constant 0.000000e+00 : f32
    %7 = vector.broadcast %cst_6 : f32 to vector<64x16xf32>
    %8 = arith.maximumf %6, %7 : vector<64x16xf32>
    %cst_7 = arith.constant 0.000000e+00 : f32
    %9 = vector.broadcast %cst_7 : f32 to vector<5x5x64xf32>
    %c0_8 = arith.constant 0 : index
    %c0_9 = arith.constant 0 : index
    %c0_10 = arith.constant 0 : index
    %10 = vector.load %arg11[%c0_8, %c0_9, %c0_10] : memref<5x5x64xf32, #tpu.memory_space<vmem>>, vector<5x5x64xf32>
    tpu.vector_store %arg11[%c0_8, %c0_9, %c0_10], %9 {strides = array<i32>} : memref<5x5x64xf32, #tpu.memory_space<vmem>>, vector<5x5x64xf32>,
    %11 = vector.extract_strided_slice %8 {offsets = [0, 0], sizes = [4, 16], strides = [1, 1]} : vector<64x16xf32> to vector<4x16xf32>
    %c1 = arith.constant 1 : index
    %c1_11 = arith.constant 1 : index
    %c0_12 = arith.constant 0 : index
    %12 = vector.load %arg11[%c1, %c1_11, %c0_12] : memref<5x5x64xf32, #tpu.memory_space<vmem>>, vector<1x4x16xf32>
    %13 = vector.shape_cast %12 : vector<1x4x16xf32> to vector<4x16xf32>
    %14 = vector.shape_cast %11 : vector<4x16xf32> to vector<1x4x16xf32>
    tpu.vector_store %arg11[%c1, %c1_11, %c0_12], %14 {strides = array<i32>} : memref<5x5x64xf32, #tpu.memory_space<vmem>>, vector<1x4x16xf32>,
    %15 = vector.extract_strided_slice %8 {offsets = [4, 0], sizes = [4, 16], strides = [1, 1]} : vector<64x16xf32> to vector<4x16xf32>
    %c2 = arith.constant 2 : index
    %c1_13 = arith.constant 1 : index
    %c0_14 = arith.constant 0 : index
    %16 = vector.load %arg11[%c2, %c1_13, %c0_14] : memref<5x5x64xf32, #tpu.memory_space<vmem>>, vector<1x4x16xf32>
    %17 = vector.shape_cast %16 : vector<1x4x16xf32> to vector<4x16xf32>
    %18 = vector.shape_cast %15 : vector<4x16xf32> to vector<1x4x16xf32>
    tpu.vector_store %arg11[%c2, %c1_13, %c0_14], %18 {strides = array<i32>} : memref<5x5x64xf32, #tpu.memory_space<vmem>>, vector<1x4x16xf32>,
    %19 = vector.extract_strided_slice %8 {offsets = [8, 0], sizes = [4, 16], strides = [1, 1]} : vector<64x16xf32> to vector<4x16xf32>
    %c3 = arith.constant 3 : index
    %c1_15 = arith.constant 1 : index
    %c0_16 = arith.constant 0 : index
    %20 = vector.load %arg11[%c3, %c1_15, %c0_16] : memref<5x5x64xf32, #tpu.memory_space<vmem>>, vector<1x4x16xf32>
    %21 = vector.shape_cast %20 : vector<1x4x16xf32> to vector<4x16xf32>
    %22 = vector.shape_cast %19 : vector<4x16xf32> to vector<1x4x16xf32>
    tpu.vector_store %arg11[%c3, %c1_15, %c0_16], %22 {strides = array<i32>} : memref<5x5x64xf32, #tpu.memory_space<vmem>>, vector<1x4x16xf32>,
    %23 = vector.extract_strided_slice %8 {offsets = [12, 0], sizes = [4, 16], strides = [1, 1]} : vector<64x16xf32> to vector<4x16xf32>
    %c4 = arith.constant 4 : index
    %c1_17 = arith.constant 1 : index
    %c0_18 = arith.constant 0 : index
    %24 = vector.load %arg11[%c4, %c1_17, %c0_18] : memref<5x5x64xf32, #tpu.memory_space<vmem>>, vector<1x4x16xf32>
    %25 = vector.shape_cast %24 : vector<1x4x16xf32> to vector<4x16xf32>
    %26 = vector.shape_cast %23 : vector<4x16xf32> to vector<1x4x16xf32>
    tpu.vector_store %arg11[%c4, %c1_17, %c0_18], %26 {strides = array<i32>} : memref<5x5x64xf32, #tpu.memory_space<vmem>>, vector<1x4x16xf32>,
    %27 = vector.extract_strided_slice %8 {offsets = [16, 0], sizes = [4, 16], strides = [1, 1]} : vector<64x16xf32> to vector<4x16xf32>
    %c1_19 = arith.constant 1 : index
    %c0_20 = arith.constant 0 : index
    %c16 = arith.constant 16 : index
    %28 = vector.load %arg11[%c1_19, %c0_20, %c16] : memref<5x5x64xf32, #tpu.memory_space<vmem>>, vector<1x4x16xf32>
    %29 = vector.shape_cast %28 : vector<1x4x16xf32> to vector<4x16xf32>
    %30 = vector.shape_cast %27 : vector<4x16xf32> to vector<1x4x16xf32>
    tpu.vector_store %arg11[%c1_19, %c0_20, %c16], %30 {strides = array<i32>} : memref<5x5x64xf32, #tpu.memory_space<vmem>>, vector<1x4x16xf32>,
    %31 = vector.extract_strided_slice %8 {offsets = [20, 0], sizes = [4, 16], strides = [1, 1]} : vector<64x16xf32> to vector<4x16xf32>
    %c2_21 = arith.constant 2 : index
    %c0_22 = arith.constant 0 : index
    %c16_23 = arith.constant 16 : index
    %32 = vector.load %arg11[%c2_21, %c0_22, %c16_23] : memref<5x5x64xf32, #tpu.memory_space<vmem>>, vector<1x4x16xf32>
    %33 = vector.shape_cast %32 : vector<1x4x16xf32> to vector<4x16xf32>
    %34 = vector.shape_cast %31 : vector<4x16xf32> to vector<1x4x16xf32>
    tpu.vector_store %arg11[%c2_21, %c0_22, %c16_23], %34 {strides = array<i32>} : memref<5x5x64xf32, #tpu.memory_space<vmem>>, vector<1x4x16xf32>,
    %35 = vector.extract_strided_slice %8 {offsets = [24, 0], sizes = [4, 16], strides = [1, 1]} : vector<64x16xf32> to vector<4x16xf32>
    %c3_24 = arith.constant 3 : index
    %c0_25 = arith.constant 0 : index
    %c16_26 = arith.constant 16 : index
    %36 = vector.load %arg11[%c3_24, %c0_25, %c16_26] : memref<5x5x64xf32, #tpu.memory_space<vmem>>, vector<1x4x16xf32>
    %37 = vector.shape_cast %36 : vector<1x4x16xf32> to vector<4x16xf32>
    %38 = vector.shape_cast %35 : vector<4x16xf32> to vector<1x4x16xf32>
    tpu.vector_store %arg11[%c3_24, %c0_25, %c16_26], %38 {strides = array<i32>} : memref<5x5x64xf32, #tpu.memory_space<vmem>>, vector<1x4x16xf32>,
    %39 = vector.extract_strided_slice %8 {offsets = [28, 0], sizes = [4, 16], strides = [1, 1]} : vector<64x16xf32> to vector<4x16xf32>
    %c4_27 = arith.constant 4 : index
    %c0_28 = arith.constant 0 : index
    %c16_29 = arith.constant 16 : index
    %40 = vector.load %arg11[%c4_27, %c0_28, %c16_29] : memref<5x5x64xf32, #tpu.memory_space<vmem>>, vector<1x4x16xf32>
    %41 = vector.shape_cast %40 : vector<1x4x16xf32> to vector<4x16xf32>
    %42 = vector.shape_cast %39 : vector<4x16xf32> to vector<1x4x16xf32>
    tpu.vector_store %arg11[%c4_27, %c0_28, %c16_29], %42 {strides = array<i32>} : memref<5x5x64xf32, #tpu.memory_space<vmem>>, vector<1x4x16xf32>,
    %43 = vector.extract_strided_slice %8 {offsets = [32, 0], sizes = [4, 16], strides = [1, 1]} : vector<64x16xf32> to vector<4x16xf32>
    %c0_30 = arith.constant 0 : index
    %c1_31 = arith.constant 1 : index
    %c32 = arith.constant 32 : index
    %44 = vector.load %arg11[%c0_30, %c1_31, %c32] : memref<5x5x64xf32, #tpu.memory_space<vmem>>, vector<1x4x16xf32>
    %45 = vector.shape_cast %44 : vector<1x4x16xf32> to vector<4x16xf32>
    %46 = vector.shape_cast %43 : vector<4x16xf32> to vector<1x4x16xf32>
    tpu.vector_store %arg11[%c0_30, %c1_31, %c32], %46 {strides = array<i32>} : memref<5x5x64xf32, #tpu.memory_space<vmem>>, vector<1x4x16xf32>,
    %47 = vector.extract_strided_slice %8 {offsets = [36, 0], sizes = [4, 16], strides = [1, 1]} : vector<64x16xf32> to vector<4x16xf32>
    %c1_32 = arith.constant 1 : index
    %c1_33 = arith.constant 1 : index
    %c32_34 = arith.constant 32 : index
    %48 = vector.load %arg11[%c1_32, %c1_33, %c32_34] : memref<5x5x64xf32, #tpu.memory_space<vmem>>, vector<1x4x16xf32>
    %49 = vector.shape_cast %48 : vector<1x4x16xf32> to vector<4x16xf32>
    %50 = vector.shape_cast %47 : vector<4x16xf32> to vector<1x4x16xf32>
    tpu.vector_store %arg11[%c1_32, %c1_33, %c32_34], %50 {strides = array<i32>} : memref<5x5x64xf32, #tpu.memory_space<vmem>>, vector<1x4x16xf32>,
    %51 = vector.extract_strided_slice %8 {offsets = [40, 0], sizes = [4, 16], strides = [1, 1]} : vector<64x16xf32> to vector<4x16xf32>
    %c2_35 = arith.constant 2 : index
    %c1_36 = arith.constant 1 : index
    %c32_37 = arith.constant 32 : index
    %52 = vector.load %arg11[%c2_35, %c1_36, %c32_37] : memref<5x5x64xf32, #tpu.memory_space<vmem>>, vector<1x4x16xf32>
    %53 = vector.shape_cast %52 : vector<1x4x16xf32> to vector<4x16xf32>
    %54 = vector.shape_cast %51 : vector<4x16xf32> to vector<1x4x16xf32>
    tpu.vector_store %arg11[%c2_35, %c1_36, %c32_37], %54 {strides = array<i32>} : memref<5x5x64xf32, #tpu.memory_space<vmem>>, vector<1x4x16xf32>,
    %55 = vector.extract_strided_slice %8 {offsets = [44, 0], sizes = [4, 16], strides = [1, 1]} : vector<64x16xf32> to vector<4x16xf32>
    %c3_38 = arith.constant 3 : index
    %c1_39 = arith.constant 1 : index
    %c32_40 = arith.constant 32 : index
    %56 = vector.load %arg11[%c3_38, %c1_39, %c32_40] : memref<5x5x64xf32, #tpu.memory_space<vmem>>, vector<1x4x16xf32>
    %57 = vector.shape_cast %56 : vector<1x4x16xf32> to vector<4x16xf32>
    %58 = vector.shape_cast %55 : vector<4x16xf32> to vector<1x4x16xf32>
    tpu.vector_store %arg11[%c3_38, %c1_39, %c32_40], %58 {strides = array<i32>} : memref<5x5x64xf32, #tpu.memory_space<vmem>>, vector<1x4x16xf32>,
    %59 = vector.extract_strided_slice %8 {offsets = [48, 0], sizes = [4, 16], strides = [1, 1]} : vector<64x16xf32> to vector<4x16xf32>
    %c0_41 = arith.constant 0 : index
    %c0_42 = arith.constant 0 : index
    %c48 = arith.constant 48 : index
    %60 = vector.load %arg11[%c0_41, %c0_42, %c48] : memref<5x5x64xf32, #tpu.memory_space<vmem>>, vector<1x4x16xf32>
    %61 = vector.shape_cast %60 : vector<1x4x16xf32> to vector<4x16xf32>
    %62 = vector.shape_cast %59 : vector<4x16xf32> to vector<1x4x16xf32>
    tpu.vector_store %arg11[%c0_41, %c0_42, %c48], %62 {strides = array<i32>} : memref<5x5x64xf32, #tpu.memory_space<vmem>>, vector<1x4x16xf32>,
    %63 = vector.extract_strided_slice %8 {offsets = [52, 0], sizes = [4, 16], strides = [1, 1]} : vector<64x16xf32> to vector<4x16xf32>
    %c1_43 = arith.constant 1 : index
    %c0_44 = arith.constant 0 : index
    %c48_45 = arith.constant 48 : index
    %64 = vector.load %arg11[%c1_43, %c0_44, %c48_45] : memref<5x5x64xf32, #tpu.memory_space<vmem>>, vector<1x4x16xf32>
    %65 = vector.shape_cast %64 : vector<1x4x16xf32> to vector<4x16xf32>
    %66 = vector.shape_cast %63 : vector<4x16xf32> to vector<1x4x16xf32>
    tpu.vector_store %arg11[%c1_43, %c0_44, %c48_45], %66 {strides = array<i32>} : memref<5x5x64xf32, #tpu.memory_space<vmem>>, vector<1x4x16xf32>,
    %67 = vector.extract_strided_slice %8 {offsets = [56, 0], sizes = [4, 16], strides = [1, 1]} : vector<64x16xf32> to vector<4x16xf32>
    %c2_46 = arith.constant 2 : index
    %c0_47 = arith.constant 0 : index
    %c48_48 = arith.constant 48 : index
    %68 = vector.load %arg11[%c2_46, %c0_47, %c48_48] : memref<5x5x64xf32, #tpu.memory_space<vmem>>, vector<1x4x16xf32>
    %69 = vector.shape_cast %68 : vector<1x4x16xf32> to vector<4x16xf32>
    %70 = vector.shape_cast %67 : vector<4x16xf32> to vector<1x4x16xf32>
    tpu.vector_store %arg11[%c2_46, %c0_47, %c48_48], %70 {strides = array<i32>} : memref<5x5x64xf32, #tpu.memory_space<vmem>>, vector<1x4x16xf32>,
    %71 = vector.extract_strided_slice %8 {offsets = [60, 0], sizes = [4, 16], strides = [1, 1]} : vector<64x16xf32> to vector<4x16xf32>
    %c3_49 = arith.constant 3 : index
    %c0_50 = arith.constant 0 : index
    %c48_51 = arith.constant 48 : index
    %72 = vector.load %arg11[%c3_49, %c0_50, %c48_51] : memref<5x5x64xf32, #tpu.memory_space<vmem>>, vector<1x4x16xf32>
    %73 = vector.shape_cast %72 : vector<1x4x16xf32> to vector<4x16xf32>
    %74 = vector.shape_cast %71 : vector<4x16xf32> to vector<1x4x16xf32>
    tpu.vector_store %arg11[%c3_49, %c0_50, %c48_51], %74 {strides = array<i32>} : memref<5x5x64xf32, #tpu.memory_space<vmem>>, vector<1x4x16xf32>,
    %c0_52 = arith.constant 0 : index
    %c0_53 = arith.constant 0 : index
    %c0_54 = arith.constant 0 : index
    %75 = vector.load %arg11[%c0_52, %c0_53, %c0_54] : memref<5x5x64xf32, #tpu.memory_space<vmem>>, vector<4x4x64xf32>
    %76 = vector.shape_cast %75 : vector<4x4x64xf32> to vector<16x64xf32>
    %c0_55 = arith.constant 0 : index
    %c0_56 = arith.constant 0 : index
    %77 = vector.load %arg13[%c0_55, %c0_56] : memref<16x288xf32, #tpu.memory_space<vmem>>, vector<16x64xf32>
    tpu.vector_store %arg13[%c0_55, %c0_56], %76 {strides = array<i32>} : memref<16x288xf32, #tpu.memory_space<vmem>>, vector<16x64xf32>,
    %c0_57 = arith.constant 0 : index
    %c1_58 = arith.constant 1 : index
    %c0_59 = arith.constant 0 : index
    %78 = vector.load %arg11[%c0_57, %c1_58, %c0_59] : memref<5x5x64xf32, #tpu.memory_space<vmem>>, vector<4x4x64xf32>
    %79 = vector.shape_cast %78 : vector<4x4x64xf32> to vector<16x64xf32>
    %c0_60 = arith.constant 0 : index
    %c64 = arith.constant 64 : index
    %80 = vector.load %arg13[%c0_60, %c64] : memref<16x288xf32, #tpu.memory_space<vmem>>, vector<16x64xf32>
    tpu.vector_store %arg13[%c0_60, %c64], %79 {strides = array<i32>} : memref<16x288xf32, #tpu.memory_space<vmem>>, vector<16x64xf32>,
    %c1_61 = arith.constant 1 : index
    %c0_62 = arith.constant 0 : index
    %c0_63 = arith.constant 0 : index
    %81 = vector.load %arg11[%c1_61, %c0_62, %c0_63] : memref<5x5x64xf32, #tpu.memory_space<vmem>>, vector<4x4x64xf32>
    %82 = vector.shape_cast %81 : vector<4x4x64xf32> to vector<16x64xf32>
    %c0_64 = arith.constant 0 : index
    %c128 = arith.constant 128 : index
    %83 = vector.load %arg13[%c0_64, %c128] : memref<16x288xf32, #tpu.memory_space<vmem>>, vector<16x64xf32>
    tpu.vector_store %arg13[%c0_64, %c128], %82 {strides = array<i32>} : memref<16x288xf32, #tpu.memory_space<vmem>>, vector<16x64xf32>,
    %c1_65 = arith.constant 1 : index
    %c1_66 = arith.constant 1 : index
    %c0_67 = arith.constant 0 : index
    %84 = vector.load %arg11[%c1_65, %c1_66, %c0_67] : memref<5x5x64xf32, #tpu.memory_space<vmem>>, vector<4x4x64xf32>
    %85 = vector.shape_cast %84 : vector<4x4x64xf32> to vector<16x64xf32>
    %c0_68 = arith.constant 0 : index
    %c192 = arith.constant 192 : index
    %86 = vector.load %arg13[%c0_68, %c192] : memref<16x288xf32, #tpu.memory_space<vmem>>, vector<16x64xf32>
    tpu.vector_store %arg13[%c0_68, %c192], %85 {strides = array<i32>} : memref<16x288xf32, #tpu.memory_space<vmem>>, vector<16x64xf32>,
    %c0_69 = arith.constant 0 : index
    %c0_70 = arith.constant 0 : index
    %87 = vector.load %arg13[%c0_69, %c0_70] : memref<16x288xf32, #tpu.memory_space<vmem>>, vector<16x256xf32>
    %88 = arith.truncf %87 : vector<16x256xf32> to vector<16x256xbf16>
    %c0_71 = arith.constant 0 : index
    %c0_72 = arith.constant 0 : index
    %89 = vector.load %arg4[%c0_71, %c0_72] : memref<256x32xbf16, #tpu.memory_space<vmem>>, vector<256x32xbf16>
    %cst_73 = arith.constant dense<0.000000e+00> : vector<16x32xf32>
    %90 = tpu.matmul %88, %89, %cst_73 {dimension_numbers = #tpu.dot_dimension_numbers<[1], [0], [0], [1], [0, 0, 1, 1], [], []>} : vector<16x256xbf16>, vector<256x32xbf16>, vector<16x32xf32> -> vector<16x32xf32>
    %c0_74 = arith.constant 0 : index
    %c0_75 = arith.constant 0 : index
    %91 = vector.load %arg5[%c0_74, %c0_75] : memref<1x32xf32, #tpu.memory_space<vmem>>, vector<1x32xf32>
    %92 = vector.broadcast %91 : vector<1x32xf32> to vector<16x32xf32>
    %93 = arith.addf %90, %92 : vector<16x32xf32>
    %cst_76 = arith.constant 0.000000e+00 : f32
    %94 = vector.broadcast %cst_76 : f32 to vector<16x32xf32>
    %95 = arith.maximumf %93, %94 : vector<16x32xf32>
    %cst_77 = arith.constant 0.000000e+00 : f32
    %96 = vector.broadcast %cst_77 : f32 to vector<6x6x32xf32>
    %c0_78 = arith.constant 0 : index
    %c0_79 = arith.constant 0 : index
    %c0_80 = arith.constant 0 : index
    %97 = vector.load %arg12[%c0_78, %c0_79, %c0_80] : memref<6x6x32xf32, #tpu.memory_space<vmem>>, vector<6x6x32xf32>
    tpu.vector_store %arg12[%c0_78, %c0_79, %c0_80], %96 {strides = array<i32>} : memref<6x6x32xf32, #tpu.memory_space<vmem>>, vector<6x6x32xf32>,
    %98 = vector.extract_strided_slice %95 {offsets = [0, 0], sizes = [4, 32], strides = [1, 1]} : vector<16x32xf32> to vector<4x32xf32>
    %c1_81 = arith.constant 1 : index
    %c1_82 = arith.constant 1 : index
    %c0_83 = arith.constant 0 : index
    %99 = vector.load %arg12[%c1_81, %c1_82, %c0_83] : memref<6x6x32xf32, #tpu.memory_space<vmem>>, vector<1x4x32xf32>
    %100 = vector.shape_cast %99 : vector<1x4x32xf32> to vector<4x32xf32>
    %101 = vector.shape_cast %98 : vector<4x32xf32> to vector<1x4x32xf32>
    tpu.vector_store %arg12[%c1_81, %c1_82, %c0_83], %101 {strides = array<i32>} : memref<6x6x32xf32, #tpu.memory_space<vmem>>, vector<1x4x32xf32>,
    %102 = vector.extract_strided_slice %95 {offsets = [4, 0], sizes = [4, 32], strides = [1, 1]} : vector<16x32xf32> to vector<4x32xf32>
    %c2_84 = arith.constant 2 : index
    %c1_85 = arith.constant 1 : index
    %c0_86 = arith.constant 0 : index
    %103 = vector.load %arg12[%c2_84, %c1_85, %c0_86] : memref<6x6x32xf32, #tpu.memory_space<vmem>>, vector<1x4x32xf32>
    %104 = vector.shape_cast %103 : vector<1x4x32xf32> to vector<4x32xf32>
    %105 = vector.shape_cast %102 : vector<4x32xf32> to vector<1x4x32xf32>
    tpu.vector_store %arg12[%c2_84, %c1_85, %c0_86], %105 {strides = array<i32>} : memref<6x6x32xf32, #tpu.memory_space<vmem>>, vector<1x4x32xf32>,
    %106 = vector.extract_strided_slice %95 {offsets = [8, 0], sizes = [4, 32], strides = [1, 1]} : vector<16x32xf32> to vector<4x32xf32>
    %c3_87 = arith.constant 3 : index
    %c1_88 = arith.constant 1 : index
    %c0_89 = arith.constant 0 : index
    %107 = vector.load %arg12[%c3_87, %c1_88, %c0_89] : memref<6x6x32xf32, #tpu.memory_space<vmem>>, vector<1x4x32xf32>
    %108 = vector.shape_cast %107 : vector<1x4x32xf32> to vector<4x32xf32>
    %109 = vector.shape_cast %106 : vector<4x32xf32> to vector<1x4x32xf32>
    tpu.vector_store %arg12[%c3_87, %c1_88, %c0_89], %109 {strides = array<i32>} : memref<6x6x32xf32, #tpu.memory_space<vmem>>, vector<1x4x32xf32>,
    %110 = vector.extract_strided_slice %95 {offsets = [12, 0], sizes = [4, 32], strides = [1, 1]} : vector<16x32xf32> to vector<4x32xf32>
    %c4_90 = arith.constant 4 : index
    %c1_91 = arith.constant 1 : index
    %c0_92 = arith.constant 0 : index
    %111 = vector.load %arg12[%c4_90, %c1_91, %c0_92] : memref<6x6x32xf32, #tpu.memory_space<vmem>>, vector<1x4x32xf32>
    %112 = vector.shape_cast %111 : vector<1x4x32xf32> to vector<4x32xf32>
    %113 = vector.shape_cast %110 : vector<4x32xf32> to vector<1x4x32xf32>
    tpu.vector_store %arg12[%c4_90, %c1_91, %c0_92], %113 {strides = array<i32>} : memref<6x6x32xf32, #tpu.memory_space<vmem>>, vector<1x4x32xf32>,
    %c0_93 = arith.constant 0 : index
    %c0_94 = arith.constant 0 : index
    %114 = vector.load %arg6[%c0_93, %c0_94] : memref<288x32xbf16, #tpu.memory_space<vmem>>, vector<288x32xbf16>
    %c0_95 = arith.constant 0 : index
    %c0_96 = arith.constant 0 : index
    %c0_97 = arith.constant 0 : index
    %115 = vector.load %arg12[%c0_95, %c0_96, %c0_97] : memref<6x6x32xf32, #tpu.memory_space<vmem>>, vector<4x4x32xf32>
    %116 = vector.shape_cast %115 : vector<4x4x32xf32> to vector<16x32xf32>
    %c0_98 = arith.constant 0 : index
    %c0_99 = arith.constant 0 : index
    %117 = vector.load %arg13[%c0_98, %c0_99] : memref<16x288xf32, #tpu.memory_space<vmem>>, vector<16x32xf32>
    tpu.vector_store %arg13[%c0_98, %c0_99], %116 {strides = array<i32>} : memref<16x288xf32, #tpu.memory_space<vmem>>, vector<16x32xf32>,
    %c0_100 = arith.constant 0 : index
    %c1_101 = arith.constant 1 : index
    %c0_102 = arith.constant 0 : index
    %118 = vector.load %arg12[%c0_100, %c1_101, %c0_102] : memref<6x6x32xf32, #tpu.memory_space<vmem>>, vector<4x4x32xf32>
    %119 = vector.shape_cast %118 : vector<4x4x32xf32> to vector<16x32xf32>
    %c0_103 = arith.constant 0 : index
    %c32_104 = arith.constant 32 : index
    %120 = vector.load %arg13[%c0_103, %c32_104] : memref<16x288xf32, #tpu.memory_space<vmem>>, vector<16x32xf32>
    tpu.vector_store %arg13[%c0_103, %c32_104], %119 {strides = array<i32>} : memref<16x288xf32, #tpu.memory_space<vmem>>, vector<16x32xf32>,
    %c0_105 = arith.constant 0 : index
    %c2_106 = arith.constant 2 : index
    %c0_107 = arith.constant 0 : index
    %121 = vector.load %arg12[%c0_105, %c2_106, %c0_107] : memref<6x6x32xf32, #tpu.memory_space<vmem>>, vector<4x4x32xf32>
    %122 = vector.shape_cast %121 : vector<4x4x32xf32> to vector<16x32xf32>
    %c0_108 = arith.constant 0 : index
    %c64_109 = arith.constant 64 : index
    %123 = vector.load %arg13[%c0_108, %c64_109] : memref<16x288xf32, #tpu.memory_space<vmem>>, vector<16x32xf32>
    tpu.vector_store %arg13[%c0_108, %c64_109], %122 {strides = array<i32>} : memref<16x288xf32, #tpu.memory_space<vmem>>, vector<16x32xf32>,
    %c1_110 = arith.constant 1 : index
    %c0_111 = arith.constant 0 : index
    %c0_112 = arith.constant 0 : index
    %124 = vector.load %arg12[%c1_110, %c0_111, %c0_112] : memref<6x6x32xf32, #tpu.memory_space<vmem>>, vector<4x4x32xf32>
    %125 = vector.shape_cast %124 : vector<4x4x32xf32> to vector<16x32xf32>
    %c0_113 = arith.constant 0 : index
    %c96 = arith.constant 96 : index
    %126 = vector.load %arg13[%c0_113, %c96] : memref<16x288xf32, #tpu.memory_space<vmem>>, vector<16x32xf32>
    tpu.vector_store %arg13[%c0_113, %c96], %125 {strides = array<i32>} : memref<16x288xf32, #tpu.memory_space<vmem>>, vector<16x32xf32>,
    %c1_114 = arith.constant 1 : index
    %c1_115 = arith.constant 1 : index
    %c0_116 = arith.constant 0 : index
    %127 = vector.load %arg12[%c1_114, %c1_115, %c0_116] : memref<6x6x32xf32, #tpu.memory_space<vmem>>, vector<4x4x32xf32>
    %128 = vector.shape_cast %127 : vector<4x4x32xf32> to vector<16x32xf32>
    %c0_117 = arith.constant 0 : index
    %c128_118 = arith.constant 128 : index
    %129 = vector.load %arg13[%c0_117, %c128_118] : memref<16x288xf32, #tpu.memory_space<vmem>>, vector<16x32xf32>
    tpu.vector_store %arg13[%c0_117, %c128_118], %128 {strides = array<i32>} : memref<16x288xf32, #tpu.memory_space<vmem>>, vector<16x32xf32>,
    %c1_119 = arith.constant 1 : index
    %c2_120 = arith.constant 2 : index
    %c0_121 = arith.constant 0 : index
    %130 = vector.load %arg12[%c1_119, %c2_120, %c0_121] : memref<6x6x32xf32, #tpu.memory_space<vmem>>, vector<4x4x32xf32>
    %131 = vector.shape_cast %130 : vector<4x4x32xf32> to vector<16x32xf32>
    %c0_122 = arith.constant 0 : index
    %c160 = arith.constant 160 : index
    %132 = vector.load %arg13[%c0_122, %c160] : memref<16x288xf32, #tpu.memory_space<vmem>>, vector<16x32xf32>
    tpu.vector_store %arg13[%c0_122, %c160], %131 {strides = array<i32>} : memref<16x288xf32, #tpu.memory_space<vmem>>, vector<16x32xf32>,
    %c2_123 = arith.constant 2 : index
    %c0_124 = arith.constant 0 : index
    %c0_125 = arith.constant 0 : index
    %133 = vector.load %arg12[%c2_123, %c0_124, %c0_125] : memref<6x6x32xf32, #tpu.memory_space<vmem>>, vector<4x4x32xf32>
    %134 = vector.shape_cast %133 : vector<4x4x32xf32> to vector<16x32xf32>
    %c0_126 = arith.constant 0 : index
    %c192_127 = arith.constant 192 : index
    %135 = vector.load %arg13[%c0_126, %c192_127] : memref<16x288xf32, #tpu.memory_space<vmem>>, vector<16x32xf32>
    tpu.vector_store %arg13[%c0_126, %c192_127], %134 {strides = array<i32>} : memref<16x288xf32, #tpu.memory_space<vmem>>, vector<16x32xf32>,
    %c2_128 = arith.constant 2 : index
    %c1_129 = arith.constant 1 : index
    %c0_130 = arith.constant 0 : index
    %136 = vector.load %arg12[%c2_128, %c1_129, %c0_130] : memref<6x6x32xf32, #tpu.memory_space<vmem>>, vector<4x4x32xf32>
    %137 = vector.shape_cast %136 : vector<4x4x32xf32> to vector<16x32xf32>
    %c0_131 = arith.constant 0 : index
    %c224 = arith.constant 224 : index
    %138 = vector.load %arg13[%c0_131, %c224] : memref<16x288xf32, #tpu.memory_space<vmem>>, vector<16x32xf32>
    tpu.vector_store %arg13[%c0_131, %c224], %137 {strides = array<i32>} : memref<16x288xf32, #tpu.memory_space<vmem>>, vector<16x32xf32>,
    %c2_132 = arith.constant 2 : index
    %c2_133 = arith.constant 2 : index
    %c0_134 = arith.constant 0 : index
    %139 = vector.load %arg12[%c2_132, %c2_133, %c0_134] : memref<6x6x32xf32, #tpu.memory_space<vmem>>, vector<4x4x32xf32>
    %140 = vector.shape_cast %139 : vector<4x4x32xf32> to vector<16x32xf32>
    %c0_135 = arith.constant 0 : index
    %c256 = arith.constant 256 : index
    %141 = vector.load %arg13[%c0_135, %c256] : memref<16x288xf32, #tpu.memory_space<vmem>>, vector<16x32xf32>
    tpu.vector_store %arg13[%c0_135, %c256], %140 {strides = array<i32>} : memref<16x288xf32, #tpu.memory_space<vmem>>, vector<16x32xf32>,
    %c0_136 = arith.constant 0 : index
    %c0_137 = arith.constant 0 : index
    %142 = vector.load %arg13[%c0_136, %c0_137] : memref<16x288xf32, #tpu.memory_space<vmem>>, vector<16x288xf32>
    %143 = arith.truncf %142 : vector<16x288xf32> to vector<16x288xbf16>
    %cst_138 = arith.constant dense<0.000000e+00> : vector<16x32xf32>
    %144 = tpu.matmul %143, %114, %cst_138 {dimension_numbers = #tpu.dot_dimension_numbers<[1], [0], [0], [1], [0, 0, 1, 1], [], []>} : vector<16x288xbf16>, vector<288x32xbf16>, vector<16x32xf32> -> vector<16x32xf32>
    %c0_139 = arith.constant 0 : index
    %c0_140 = arith.constant 0 : index
    %145 = vector.load %arg7[%c0_139, %c0_140] : memref<1x32xf32, #tpu.memory_space<vmem>>, vector<1x32xf32>
    %146 = vector.broadcast %145 : vector<1x32xf32> to vector<16x32xf32>
    %147 = arith.addf %144, %146 : vector<16x32xf32>
    %cst_141 = arith.constant 0.000000e+00 : f32
    %148 = vector.broadcast %cst_141 : f32 to vector<16x32xf32>
    %149 = arith.maximumf %147, %148 : vector<16x32xf32>
    %150 = vector.extract_strided_slice %149 {offsets = [0, 0], sizes = [4, 32], strides = [1, 1]} : vector<16x32xf32> to vector<4x32xf32>
    %c1_142 = arith.constant 1 : index
    %c1_143 = arith.constant 1 : index
    %c0_144 = arith.constant 0 : index
    %151 = vector.load %arg12[%c1_142, %c1_143, %c0_144] : memref<6x6x32xf32, #tpu.memory_space<vmem>>, vector<1x4x32xf32>
    %152 = vector.shape_cast %151 : vector<1x4x32xf32> to vector<4x32xf32>
    %153 = vector.shape_cast %150 : vector<4x32xf32> to vector<1x4x32xf32>
    tpu.vector_store %arg12[%c1_142, %c1_143, %c0_144], %153 {strides = array<i32>} : memref<6x6x32xf32, #tpu.memory_space<vmem>>, vector<1x4x32xf32>,
    %154 = vector.extract_strided_slice %149 {offsets = [4, 0], sizes = [4, 32], strides = [1, 1]} : vector<16x32xf32> to vector<4x32xf32>
    %c2_145 = arith.constant 2 : index
    %c1_146 = arith.constant 1 : index
    %c0_147 = arith.constant 0 : index
    %155 = vector.load %arg12[%c2_145, %c1_146, %c0_147] : memref<6x6x32xf32, #tpu.memory_space<vmem>>, vector<1x4x32xf32>
    %156 = vector.shape_cast %155 : vector<1x4x32xf32> to vector<4x32xf32>
    %157 = vector.shape_cast %154 : vector<4x32xf32> to vector<1x4x32xf32>
    tpu.vector_store %arg12[%c2_145, %c1_146, %c0_147], %157 {strides = array<i32>} : memref<6x6x32xf32, #tpu.memory_space<vmem>>, vector<1x4x32xf32>,
    %158 = vector.extract_strided_slice %149 {offsets = [8, 0], sizes = [4, 32], strides = [1, 1]} : vector<16x32xf32> to vector<4x32xf32>
    %c3_148 = arith.constant 3 : index
    %c1_149 = arith.constant 1 : index
    %c0_150 = arith.constant 0 : index
    %159 = vector.load %arg12[%c3_148, %c1_149, %c0_150] : memref<6x6x32xf32, #tpu.memory_space<vmem>>, vector<1x4x32xf32>
    %160 = vector.shape_cast %159 : vector<1x4x32xf32> to vector<4x32xf32>
    %161 = vector.shape_cast %158 : vector<4x32xf32> to vector<1x4x32xf32>
    tpu.vector_store %arg12[%c3_148, %c1_149, %c0_150], %161 {strides = array<i32>} : memref<6x6x32xf32, #tpu.memory_space<vmem>>, vector<1x4x32xf32>,
    %162 = vector.extract_strided_slice %149 {offsets = [12, 0], sizes = [4, 32], strides = [1, 1]} : vector<16x32xf32> to vector<4x32xf32>
    %c4_151 = arith.constant 4 : index
    %c1_152 = arith.constant 1 : index
    %c0_153 = arith.constant 0 : index
    %163 = vector.load %arg12[%c4_151, %c1_152, %c0_153] : memref<6x6x32xf32, #tpu.memory_space<vmem>>, vector<1x4x32xf32>
    %164 = vector.shape_cast %163 : vector<1x4x32xf32> to vector<4x32xf32>
    %165 = vector.shape_cast %162 : vector<4x32xf32> to vector<1x4x32xf32>
    tpu.vector_store %arg12[%c4_151, %c1_152, %c0_153], %165 {strides = array<i32>} : memref<6x6x32xf32, #tpu.memory_space<vmem>>, vector<1x4x32xf32>,
    %c0_154 = arith.constant 0 : index
    %c0_155 = arith.constant 0 : index
    %c0_156 = arith.constant 0 : index
    %166 = vector.load %arg8[%c0_154, %c0_155, %c0_156] : memref<2x288x8xbf16, #tpu.memory_space<vmem>>, vector<1x288x8xbf16>
    %167 = vector.shape_cast %166 : vector<1x288x8xbf16> to vector<288x8xbf16>
    %c0_157 = arith.constant 0 : index
    %c0_158 = arith.constant 0 : index
    %c0_159 = arith.constant 0 : index
    %168 = vector.load %arg12[%c0_157, %c0_158, %c0_159] : memref<6x6x32xf32, #tpu.memory_space<vmem>>, vector<4x4x32xf32>
    %169 = vector.shape_cast %168 : vector<4x4x32xf32> to vector<16x32xf32>
    %c0_160 = arith.constant 0 : index
    %c0_161 = arith.constant 0 : index
    %170 = vector.load %arg13[%c0_160, %c0_161] : memref<16x288xf32, #tpu.memory_space<vmem>>, vector<16x32xf32>
    tpu.vector_store %arg13[%c0_160, %c0_161], %169 {strides = array<i32>} : memref<16x288xf32, #tpu.memory_space<vmem>>, vector<16x32xf32>,
    %c0_162 = arith.constant 0 : index
    %c1_163 = arith.constant 1 : index
    %c0_164 = arith.constant 0 : index
    %171 = vector.load %arg12[%c0_162, %c1_163, %c0_164] : memref<6x6x32xf32, #tpu.memory_space<vmem>>, vector<4x4x32xf32>
    %172 = vector.shape_cast %171 : vector<4x4x32xf32> to vector<16x32xf32>
    %c0_165 = arith.constant 0 : index
    %c32_166 = arith.constant 32 : index
    %173 = vector.load %arg13[%c0_165, %c32_166] : memref<16x288xf32, #tpu.memory_space<vmem>>, vector<16x32xf32>
    tpu.vector_store %arg13[%c0_165, %c32_166], %172 {strides = array<i32>} : memref<16x288xf32, #tpu.memory_space<vmem>>, vector<16x32xf32>,
    %c0_167 = arith.constant 0 : index
    %c2_168 = arith.constant 2 : index
    %c0_169 = arith.constant 0 : index
    %174 = vector.load %arg12[%c0_167, %c2_168, %c0_169] : memref<6x6x32xf32, #tpu.memory_space<vmem>>, vector<4x4x32xf32>
    %175 = vector.shape_cast %174 : vector<4x4x32xf32> to vector<16x32xf32>
    %c0_170 = arith.constant 0 : index
    %c64_171 = arith.constant 64 : index
    %176 = vector.load %arg13[%c0_170, %c64_171] : memref<16x288xf32, #tpu.memory_space<vmem>>, vector<16x32xf32>
    tpu.vector_store %arg13[%c0_170, %c64_171], %175 {strides = array<i32>} : memref<16x288xf32, #tpu.memory_space<vmem>>, vector<16x32xf32>,
    %c1_172 = arith.constant 1 : index
    %c0_173 = arith.constant 0 : index
    %c0_174 = arith.constant 0 : index
    %177 = vector.load %arg12[%c1_172, %c0_173, %c0_174] : memref<6x6x32xf32, #tpu.memory_space<vmem>>, vector<4x4x32xf32>
    %178 = vector.shape_cast %177 : vector<4x4x32xf32> to vector<16x32xf32>
    %c0_175 = arith.constant 0 : index
    %c96_176 = arith.constant 96 : index
    %179 = vector.load %arg13[%c0_175, %c96_176] : memref<16x288xf32, #tpu.memory_space<vmem>>, vector<16x32xf32>
    tpu.vector_store %arg13[%c0_175, %c96_176], %178 {strides = array<i32>} : memref<16x288xf32, #tpu.memory_space<vmem>>, vector<16x32xf32>,
    %c1_177 = arith.constant 1 : index
    %c1_178 = arith.constant 1 : index
    %c0_179 = arith.constant 0 : index
    %180 = vector.load %arg12[%c1_177, %c1_178, %c0_179] : memref<6x6x32xf32, #tpu.memory_space<vmem>>, vector<4x4x32xf32>
    %181 = vector.shape_cast %180 : vector<4x4x32xf32> to vector<16x32xf32>
    %c0_180 = arith.constant 0 : index
    %c128_181 = arith.constant 128 : index
    %182 = vector.load %arg13[%c0_180, %c128_181] : memref<16x288xf32, #tpu.memory_space<vmem>>, vector<16x32xf32>
    tpu.vector_store %arg13[%c0_180, %c128_181], %181 {strides = array<i32>} : memref<16x288xf32, #tpu.memory_space<vmem>>, vector<16x32xf32>,
    %c1_182 = arith.constant 1 : index
    %c2_183 = arith.constant 2 : index
    %c0_184 = arith.constant 0 : index
    %183 = vector.load %arg12[%c1_182, %c2_183, %c0_184] : memref<6x6x32xf32, #tpu.memory_space<vmem>>, vector<4x4x32xf32>
    %184 = vector.shape_cast %183 : vector<4x4x32xf32> to vector<16x32xf32>
    %c0_185 = arith.constant 0 : index
    %c160_186 = arith.constant 160 : index
    %185 = vector.load %arg13[%c0_185, %c160_186] : memref<16x288xf32, #tpu.memory_space<vmem>>, vector<16x32xf32>
    tpu.vector_store %arg13[%c0_185, %c160_186], %184 {strides = array<i32>} : memref<16x288xf32, #tpu.memory_space<vmem>>, vector<16x32xf32>,
    %c2_187 = arith.constant 2 : index
    %c0_188 = arith.constant 0 : index
    %c0_189 = arith.constant 0 : index
    %186 = vector.load %arg12[%c2_187, %c0_188, %c0_189] : memref<6x6x32xf32, #tpu.memory_space<vmem>>, vector<4x4x32xf32>
    %187 = vector.shape_cast %186 : vector<4x4x32xf32> to vector<16x32xf32>
    %c0_190 = arith.constant 0 : index
    %c192_191 = arith.constant 192 : index
    %188 = vector.load %arg13[%c0_190, %c192_191] : memref<16x288xf32, #tpu.memory_space<vmem>>, vector<16x32xf32>
    tpu.vector_store %arg13[%c0_190, %c192_191], %187 {strides = array<i32>} : memref<16x288xf32, #tpu.memory_space<vmem>>, vector<16x32xf32>,
    %c2_192 = arith.constant 2 : index
    %c1_193 = arith.constant 1 : index
    %c0_194 = arith.constant 0 : index
    %189 = vector.load %arg12[%c2_192, %c1_193, %c0_194] : memref<6x6x32xf32, #tpu.memory_space<vmem>>, vector<4x4x32xf32>
    %190 = vector.shape_cast %189 : vector<4x4x32xf32> to vector<16x32xf32>
    %c0_195 = arith.constant 0 : index
    %c224_196 = arith.constant 224 : index
    %191 = vector.load %arg13[%c0_195, %c224_196] : memref<16x288xf32, #tpu.memory_space<vmem>>, vector<16x32xf32>
    tpu.vector_store %arg13[%c0_195, %c224_196], %190 {strides = array<i32>} : memref<16x288xf32, #tpu.memory_space<vmem>>, vector<16x32xf32>,
    %c2_197 = arith.constant 2 : index
    %c2_198 = arith.constant 2 : index
    %c0_199 = arith.constant 0 : index
    %192 = vector.load %arg12[%c2_197, %c2_198, %c0_199] : memref<6x6x32xf32, #tpu.memory_space<vmem>>, vector<4x4x32xf32>
    %193 = vector.shape_cast %192 : vector<4x4x32xf32> to vector<16x32xf32>
    %c0_200 = arith.constant 0 : index
    %c256_201 = arith.constant 256 : index
    %194 = vector.load %arg13[%c0_200, %c256_201] : memref<16x288xf32, #tpu.memory_space<vmem>>, vector<16x32xf32>
    tpu.vector_store %arg13[%c0_200, %c256_201], %193 {strides = array<i32>} : memref<16x288xf32, #tpu.memory_space<vmem>>, vector<16x32xf32>,
    %c0_202 = arith.constant 0 : index
    %c0_203 = arith.constant 0 : index
    %195 = vector.load %arg13[%c0_202, %c0_203] : memref<16x288xf32, #tpu.memory_space<vmem>>, vector<16x288xf32>
    %196 = arith.truncf %195 : vector<16x288xf32> to vector<16x288xbf16>
    %cst_204 = arith.constant dense<0.000000e+00> : vector<16x8xf32>
    %197 = tpu.matmul %196, %167, %cst_204 {dimension_numbers = #tpu.dot_dimension_numbers<[1], [0], [0], [1], [0, 0, 1, 1], [], []>} : vector<16x288xbf16>, vector<288x8xbf16>, vector<16x8xf32> -> vector<16x8xf32>
    %cst_205 = arith.constant 0.000000e+00 : f32
    %198 = vector.broadcast %cst_205 : f32 to vector<16x8xf32>
    %199 = arith.maximumf %197, %198 : vector<16x8xf32>
    %200 = arith.truncf %199 : vector<16x8xf32> to vector<16x8xbf16>
    %c0_206 = arith.constant 0 : index
    %c0_207 = arith.constant 0 : index
    %c0_208 = arith.constant 0 : index
    %201 = vector.load %arg9[%c0_206, %c0_207, %c0_208] : memref<2x8x32xbf16, #tpu.memory_space<vmem>>, vector<1x8x32xbf16>
    %202 = vector.shape_cast %201 : vector<1x8x32xbf16> to vector<8x32xbf16>
    %cst_209 = arith.constant dense<0.000000e+00> : vector<16x32xf32>
    %203 = tpu.matmul %200, %202, %cst_209 {dimension_numbers = #tpu.dot_dimension_numbers<[1], [0], [0], [1], [0, 0, 1, 1], [], []>} : vector<16x8xbf16>, vector<8x32xbf16>, vector<16x32xf32> -> vector<16x32xf32>
    %204 = arith.addf %147, %203 : vector<16x32xf32>
    %cst_210 = arith.constant 0.000000e+00 : f32
    %205 = vector.broadcast %cst_210 : f32 to vector<16x32xf32>
    %206 = arith.maximumf %204, %205 : vector<16x32xf32>
    %207 = vector.extract_strided_slice %206 {offsets = [0, 0], sizes = [4, 32], strides = [1, 1]} : vector<16x32xf32> to vector<4x32xf32>
    %c1_211 = arith.constant 1 : index
    %c1_212 = arith.constant 1 : index
    %c0_213 = arith.constant 0 : index
    %208 = vector.load %arg12[%c1_211, %c1_212, %c0_213] : memref<6x6x32xf32, #tpu.memory_space<vmem>>, vector<1x4x32xf32>
    %209 = vector.shape_cast %208 : vector<1x4x32xf32> to vector<4x32xf32>
    %210 = vector.shape_cast %207 : vector<4x32xf32> to vector<1x4x32xf32>
    tpu.vector_store %arg12[%c1_211, %c1_212, %c0_213], %210 {strides = array<i32>} : memref<6x6x32xf32, #tpu.memory_space<vmem>>, vector<1x4x32xf32>,
    %211 = vector.extract_strided_slice %206 {offsets = [4, 0], sizes = [4, 32], strides = [1, 1]} : vector<16x32xf32> to vector<4x32xf32>
    %c2_214 = arith.constant 2 : index
    %c1_215 = arith.constant 1 : index
    %c0_216 = arith.constant 0 : index
    %212 = vector.load %arg12[%c2_214, %c1_215, %c0_216] : memref<6x6x32xf32, #tpu.memory_space<vmem>>, vector<1x4x32xf32>
    %213 = vector.shape_cast %212 : vector<1x4x32xf32> to vector<4x32xf32>
    %214 = vector.shape_cast %211 : vector<4x32xf32> to vector<1x4x32xf32>
    tpu.vector_store %arg12[%c2_214, %c1_215, %c0_216], %214 {strides = array<i32>} : memref<6x6x32xf32, #tpu.memory_space<vmem>>, vector<1x4x32xf32>,
    %215 = vector.extract_strided_slice %206 {offsets = [8, 0], sizes = [4, 32], strides = [1, 1]} : vector<16x32xf32> to vector<4x32xf32>
    %c3_217 = arith.constant 3 : index
    %c1_218 = arith.constant 1 : index
    %c0_219 = arith.constant 0 : index
    %216 = vector.load %arg12[%c3_217, %c1_218, %c0_219] : memref<6x6x32xf32, #tpu.memory_space<vmem>>, vector<1x4x32xf32>
    %217 = vector.shape_cast %216 : vector<1x4x32xf32> to vector<4x32xf32>
    %218 = vector.shape_cast %215 : vector<4x32xf32> to vector<1x4x32xf32>
    tpu.vector_store %arg12[%c3_217, %c1_218, %c0_219], %218 {strides = array<i32>} : memref<6x6x32xf32, #tpu.memory_space<vmem>>, vector<1x4x32xf32>,
    %219 = vector.extract_strided_slice %206 {offsets = [12, 0], sizes = [4, 32], strides = [1, 1]} : vector<16x32xf32> to vector<4x32xf32>
    %c4_220 = arith.constant 4 : index
    %c1_221 = arith.constant 1 : index
    %c0_222 = arith.constant 0 : index
    %220 = vector.load %arg12[%c4_220, %c1_221, %c0_222] : memref<6x6x32xf32, #tpu.memory_space<vmem>>, vector<1x4x32xf32>
    %221 = vector.shape_cast %220 : vector<1x4x32xf32> to vector<4x32xf32>
    %222 = vector.shape_cast %219 : vector<4x32xf32> to vector<1x4x32xf32>
    tpu.vector_store %arg12[%c4_220, %c1_221, %c0_222], %222 {strides = array<i32>} : memref<6x6x32xf32, #tpu.memory_space<vmem>>, vector<1x4x32xf32>,
    %c1_223 = arith.constant 1 : index
    %c0_224 = arith.constant 0 : index
    %c0_225 = arith.constant 0 : index
    %223 = vector.load %arg8[%c1_223, %c0_224, %c0_225] : memref<2x288x8xbf16, #tpu.memory_space<vmem>>, vector<1x288x8xbf16>
    %224 = vector.shape_cast %223 : vector<1x288x8xbf16> to vector<288x8xbf16>
    %c0_226 = arith.constant 0 : index
    %c0_227 = arith.constant 0 : index
    %c0_228 = arith.constant 0 : index
    %225 = vector.load %arg12[%c0_226, %c0_227, %c0_228] : memref<6x6x32xf32, #tpu.memory_space<vmem>>, vector<4x4x32xf32>
    %226 = vector.shape_cast %225 : vector<4x4x32xf32> to vector<16x32xf32>
    %c0_229 = arith.constant 0 : index
    %c0_230 = arith.constant 0 : index
    %227 = vector.load %arg13[%c0_229, %c0_230] : memref<16x288xf32, #tpu.memory_space<vmem>>, vector<16x32xf32>
    tpu.vector_store %arg13[%c0_229, %c0_230], %226 {strides = array<i32>} : memref<16x288xf32, #tpu.memory_space<vmem>>, vector<16x32xf32>,
    %c0_231 = arith.constant 0 : index
    %c1_232 = arith.constant 1 : index
    %c0_233 = arith.constant 0 : index
    %228 = vector.load %arg12[%c0_231, %c1_232, %c0_233] : memref<6x6x32xf32, #tpu.memory_space<vmem>>, vector<4x4x32xf32>
    %229 = vector.shape_cast %228 : vector<4x4x32xf32> to vector<16x32xf32>
    %c0_234 = arith.constant 0 : index
    %c32_235 = arith.constant 32 : index
    %230 = vector.load %arg13[%c0_234, %c32_235] : memref<16x288xf32, #tpu.memory_space<vmem>>, vector<16x32xf32>
    tpu.vector_store %arg13[%c0_234, %c32_235], %229 {strides = array<i32>} : memref<16x288xf32, #tpu.memory_space<vmem>>, vector<16x32xf32>,
    %c0_236 = arith.constant 0 : index
    %c2_237 = arith.constant 2 : index
    %c0_238 = arith.constant 0 : index
    %231 = vector.load %arg12[%c0_236, %c2_237, %c0_238] : memref<6x6x32xf32, #tpu.memory_space<vmem>>, vector<4x4x32xf32>
    %232 = vector.shape_cast %231 : vector<4x4x32xf32> to vector<16x32xf32>
    %c0_239 = arith.constant 0 : index
    %c64_240 = arith.constant 64 : index
    %233 = vector.load %arg13[%c0_239, %c64_240] : memref<16x288xf32, #tpu.memory_space<vmem>>, vector<16x32xf32>
    tpu.vector_store %arg13[%c0_239, %c64_240], %232 {strides = array<i32>} : memref<16x288xf32, #tpu.memory_space<vmem>>, vector<16x32xf32>,
    %c1_241 = arith.constant 1 : index
    %c0_242 = arith.constant 0 : index
    %c0_243 = arith.constant 0 : index
    %234 = vector.load %arg12[%c1_241, %c0_242, %c0_243] : memref<6x6x32xf32, #tpu.memory_space<vmem>>, vector<4x4x32xf32>
    %235 = vector.shape_cast %234 : vector<4x4x32xf32> to vector<16x32xf32>
    %c0_244 = arith.constant 0 : index
    %c96_245 = arith.constant 96 : index
    %236 = vector.load %arg13[%c0_244, %c96_245] : memref<16x288xf32, #tpu.memory_space<vmem>>, vector<16x32xf32>
    tpu.vector_store %arg13[%c0_244, %c96_245], %235 {strides = array<i32>} : memref<16x288xf32, #tpu.memory_space<vmem>>, vector<16x32xf32>,
    %c1_246 = arith.constant 1 : index
    %c1_247 = arith.constant 1 : index
    %c0_248 = arith.constant 0 : index
    %237 = vector.load %arg12[%c1_246, %c1_247, %c0_248] : memref<6x6x32xf32, #tpu.memory_space<vmem>>, vector<4x4x32xf32>
    %238 = vector.shape_cast %237 : vector<4x4x32xf32> to vector<16x32xf32>
    %c0_249 = arith.constant 0 : index
    %c128_250 = arith.constant 128 : index
    %239 = vector.load %arg13[%c0_249, %c128_250] : memref<16x288xf32, #tpu.memory_space<vmem>>, vector<16x32xf32>
    tpu.vector_store %arg13[%c0_249, %c128_250], %238 {strides = array<i32>} : memref<16x288xf32, #tpu.memory_space<vmem>>, vector<16x32xf32>,
    %c1_251 = arith.constant 1 : index
    %c2_252 = arith.constant 2 : index
    %c0_253 = arith.constant 0 : index
    %240 = vector.load %arg12[%c1_251, %c2_252, %c0_253] : memref<6x6x32xf32, #tpu.memory_space<vmem>>, vector<4x4x32xf32>
    %241 = vector.shape_cast %240 : vector<4x4x32xf32> to vector<16x32xf32>
    %c0_254 = arith.constant 0 : index
    %c160_255 = arith.constant 160 : index
    %242 = vector.load %arg13[%c0_254, %c160_255] : memref<16x288xf32, #tpu.memory_space<vmem>>, vector<16x32xf32>
    tpu.vector_store %arg13[%c0_254, %c160_255], %241 {strides = array<i32>} : memref<16x288xf32, #tpu.memory_space<vmem>>, vector<16x32xf32>,
    %c2_256 = arith.constant 2 : index
    %c0_257 = arith.constant 0 : index
    %c0_258 = arith.constant 0 : index
    %243 = vector.load %arg12[%c2_256, %c0_257, %c0_258] : memref<6x6x32xf32, #tpu.memory_space<vmem>>, vector<4x4x32xf32>
    %244 = vector.shape_cast %243 : vector<4x4x32xf32> to vector<16x32xf32>
    %c0_259 = arith.constant 0 : index
    %c192_260 = arith.constant 192 : index
    %245 = vector.load %arg13[%c0_259, %c192_260] : memref<16x288xf32, #tpu.memory_space<vmem>>, vector<16x32xf32>
    tpu.vector_store %arg13[%c0_259, %c192_260], %244 {strides = array<i32>} : memref<16x288xf32, #tpu.memory_space<vmem>>, vector<16x32xf32>,
    %c2_261 = arith.constant 2 : index
    %c1_262 = arith.constant 1 : index
    %c0_263 = arith.constant 0 : index
    %246 = vector.load %arg12[%c2_261, %c1_262, %c0_263] : memref<6x6x32xf32, #tpu.memory_space<vmem>>, vector<4x4x32xf32>
    %247 = vector.shape_cast %246 : vector<4x4x32xf32> to vector<16x32xf32>
    %c0_264 = arith.constant 0 : index
    %c224_265 = arith.constant 224 : index
    %248 = vector.load %arg13[%c0_264, %c224_265] : memref<16x288xf32, #tpu.memory_space<vmem>>, vector<16x32xf32>
    tpu.vector_store %arg13[%c0_264, %c224_265], %247 {strides = array<i32>} : memref<16x288xf32, #tpu.memory_space<vmem>>, vector<16x32xf32>,
    %c2_266 = arith.constant 2 : index
    %c2_267 = arith.constant 2 : index
    %c0_268 = arith.constant 0 : index
    %249 = vector.load %arg12[%c2_266, %c2_267, %c0_268] : memref<6x6x32xf32, #tpu.memory_space<vmem>>, vector<4x4x32xf32>
    %250 = vector.shape_cast %249 : vector<4x4x32xf32> to vector<16x32xf32>
    %c0_269 = arith.constant 0 : index
    %c256_270 = arith.constant 256 : index
    %251 = vector.load %arg13[%c0_269, %c256_270] : memref<16x288xf32, #tpu.memory_space<vmem>>, vector<16x32xf32>
    tpu.vector_store %arg13[%c0_269, %c256_270], %250 {strides = array<i32>} : memref<16x288xf32, #tpu.memory_space<vmem>>, vector<16x32xf32>,
    %c0_271 = arith.constant 0 : index
    %c0_272 = arith.constant 0 : index
    %252 = vector.load %arg13[%c0_271, %c0_272] : memref<16x288xf32, #tpu.memory_space<vmem>>, vector<16x288xf32>
    %253 = arith.truncf %252 : vector<16x288xf32> to vector<16x288xbf16>
    %cst_273 = arith.constant dense<0.000000e+00> : vector<16x8xf32>
    %254 = tpu.matmul %253, %224, %cst_273 {dimension_numbers = #tpu.dot_dimension_numbers<[1], [0], [0], [1], [0, 0, 1, 1], [], []>} : vector<16x288xbf16>, vector<288x8xbf16>, vector<16x8xf32> -> vector<16x8xf32>
    %cst_274 = arith.constant 0.000000e+00 : f32
    %255 = vector.broadcast %cst_274 : f32 to vector<16x8xf32>
    %256 = arith.maximumf %254, %255 : vector<16x8xf32>
    %257 = arith.truncf %256 : vector<16x8xf32> to vector<16x8xbf16>
    %c1_275 = arith.constant 1 : index
    %c0_276 = arith.constant 0 : index
    %c0_277 = arith.constant 0 : index
    %258 = vector.load %arg9[%c1_275, %c0_276, %c0_277] : memref<2x8x32xbf16, #tpu.memory_space<vmem>>, vector<1x8x32xbf16>
    %259 = vector.shape_cast %258 : vector<1x8x32xbf16> to vector<8x32xbf16>
    %cst_278 = arith.constant dense<0.000000e+00> : vector<16x32xf32>
    %260 = tpu.matmul %257, %259, %cst_278 {dimension_numbers = #tpu.dot_dimension_numbers<[1], [0], [0], [1], [0, 0, 1, 1], [], []>} : vector<16x8xbf16>, vector<8x32xbf16>, vector<16x32xf32> -> vector<16x32xf32>
    %261 = arith.addf %204, %260 : vector<16x32xf32>
    %cst_279 = arith.constant 0.000000e+00 : f32
    %262 = vector.broadcast %cst_279 : f32 to vector<16x32xf32>
    %263 = arith.maximumf %261, %262 : vector<16x32xf32>
    %c0_280 = arith.constant 0 : index
    %c0_281 = arith.constant 0 : index
    %c0_282 = arith.constant 0 : index
    %264 = vector.load %arg10[%c0_280, %c0_281, %c0_282] : memref<1x16x32xf32, #tpu.memory_space<vmem>>, vector<1x16x32xf32>
    %265 = vector.shape_cast %264 : vector<1x16x32xf32> to vector<16x32xf32>
    %266 = vector.shape_cast %263 : vector<16x32xf32> to vector<1x16x32xf32>
    tpu.vector_store %arg10[%c0_280, %c0_281, %c0_282], %266 {strides = array<i32>} : memref<1x16x32xf32, #tpu.memory_space<vmem>>, vector<1x16x32xf32>,
    return
  }
  func.func @transform_0(%arg0: i32) -> (i32, i32, i32) {
    %c0_i32 = arith.constant 0 : i32
    %c0_i32_0 = arith.constant 0 : i32
    %c0_i32_1 = arith.constant 0 : i32
    return %arg0, %c0_i32, %c0_i32_0 : i32, i32, i32
  }
  func.func @transform_1(%arg0: i32) -> (i32, i32) {
    %c0_i32 = arith.constant 0 : i32
    %c0_i32_0 = arith.constant 0 : i32
    %c0_i32_1 = arith.constant 0 : i32
    return %c0_i32, %c0_i32_0 : i32, i32
  }
  func.func @transform_2(%arg0: i32) -> (i32, i32) {
    %c0_i32 = arith.constant 0 : i32
    %c0_i32_0 = arith.constant 0 : i32
    %c0_i32_1 = arith.constant 0 : i32
    return %c0_i32, %c0_i32_0 : i32, i32
  }
  func.func @transform_3(%arg0: i32) -> (i32, i32) {
    %c0_i32 = arith.constant 0 : i32
    %c0_i32_0 = arith.constant 0 : i32
    %c0_i32_1 = arith.constant 0 : i32
    return %c0_i32, %c0_i32_0 : i32, i32
  }
  func.func @transform_4(%arg0: i32) -> (i32, i32) {
    %c0_i32 = arith.constant 0 : i32
    %c0_i32_0 = arith.constant 0 : i32
    %c0_i32_1 = arith.constant 0 : i32
    return %c0_i32, %c0_i32_0 : i32, i32
  }
  func.func @transform_5(%arg0: i32) -> (i32, i32) {
    %c0_i32 = arith.constant 0 : i32
    %c0_i32_0 = arith.constant 0 : i32
    %c0_i32_1 = arith.constant 0 : i32
    return %c0_i32, %c0_i32_0 : i32, i32
  }
  func.func @transform_6(%arg0: i32) -> (i32, i32) {
    %c0_i32 = arith.constant 0 : i32
    %c0_i32_0 = arith.constant 0 : i32
    %c0_i32_1 = arith.constant 0 : i32
    return %c0_i32, %c0_i32_0 : i32, i32
  }
  func.func @transform_7(%arg0: i32) -> (i32, i32, i32) {
    %c0_i32 = arith.constant 0 : i32
    %c0_i32_0 = arith.constant 0 : i32
    %c0_i32_1 = arith.constant 0 : i32
    %c0_i32_2 = arith.constant 0 : i32
    return %c0_i32, %c0_i32_0, %c0_i32_1 : i32, i32, i32
  }
  func.func @transform_8(%arg0: i32) -> (i32, i32, i32) {
    %c0_i32 = arith.constant 0 : i32
    %c0_i32_0 = arith.constant 0 : i32
    %c0_i32_1 = arith.constant 0 : i32
    %c0_i32_2 = arith.constant 0 : i32
    return %c0_i32, %c0_i32_0, %c0_i32_1 : i32, i32, i32
  }
  func.func @transform_9(%arg0: i32) -> (i32, i32, i32) {
    %c0_i32 = arith.constant 0 : i32
    %c0_i32_0 = arith.constant 0 : i32
    %c0_i32_1 = arith.constant 0 : i32
    return %arg0, %c0_i32, %c0_i32_0 : i32, i32, i32
  }
}

</mosaic_0001>

<llo_original>
// kernel: encoder_forward.1
$region0: #{encoder_forward.1}
  #allocation0 [shape = 'u32[]', space=smem, size = 0x4, offset = 0x4, fixed_abs, tag = 'smem constant byte address 0x4 - core index']
  #allocation1 [shape = 'u32[144,128]{1,0:T(1,128)}', space=vmem, size = 0x12000, scoped, tag = 'internal scratch']
  #allocation2 [shape = 'f32[5,5,64]{2,1,0:T(8,128)}', space=vmem, size = 0x5000, scoped, tag = 'scratch operand']
  #allocation3 [shape = 'f32[6,6,32]{2,1,0:T(8,128)}', space=vmem, size = 0x6000, scoped, tag = 'scratch operand']
  #allocation4 [shape = 'f32[16,288]{1,0:T(8,128)}', space=vmem, size = 0x6000, scoped, tag = 'scratch operand']
  %s0 = inlined_call_operand.vmem [shape: bf16[2,64,64], index: 0, kind: input, shape index: {}]
  %s1 = inlined_call_operand.vmem [shape: bf16[64,16], index: 1, kind: input, shape index: {}]
  %s2 = inlined_call_operand.vmem [shape: f32[1,16], index: 2, kind: input, shape index: {}]
  %s3 = inlined_call_operand.vmem [shape: bf16[256,32], index: 3, kind: input, shape index: {}]
  %s4 = inlined_call_operand.vmem [shape: f32[1,32], index: 4, kind: input, shape index: {}]
  %s5 = inlined_call_operand.vmem [shape: bf16[288,32], index: 5, kind: input, shape index: {}]
  %s6 = inlined_call_operand.vmem [shape: f32[1,32], index: 6, kind: input, shape index: {}]
  %s7 = inlined_call_operand.vmem [shape: bf16[2,288,8], index: 7, kind: input, shape index: {}]
  %s8 = inlined_call_operand.vmem [shape: bf16[2,8,32], index: 8, kind: input, shape index: {}]
  %s9 = inlined_call_operand.hbm [shape: f32[2,16,32], index: 9, kind: output, shape index: {}]
  %s10 = sld [smem:[#allocation0]]
  $region69: #{encoder_forward.1} parent=0
    _
  %s12 = ssub.s32 1, %s10
  %s13 = scalar_select 0, %s12, %s10
  $region1: #{encoder_forward.1} parent=0
    #allocation5 [shape = 'u8[16384]{0}', space=vmem, size = 0x4000, scoped, tag = 'output window, operand 0']
    #allocation6 [shape = 's32[2]{0}', space=sflag, size = 0x8, scoped, tag = 'scoped memory for encoder_forward.1']
    %14 = vsyncpa [#allocation6], 0
    %s15 = scalar_lea.sflag [#allocation6], 1
    %16 = vsyncpa %s15, 0
    loop: start=0, step=1, limit=4
    $region2: #{encoder_forward.1} parent=1 // loop_pre_header
      _
    $region3: #{encoder_forward.1} parent=1 // loop_header
      %s18 = sphi 0, %s22
      %p19 = scmp.ge.s32.totalorder %s18, 4
      %s28 = sphi 0, %s30
      %s31 = sphi 0, %s28
      %s32 = sphi 0, %s31
      %s48 = sphi 0, %s32
      %s52 = sphi 0, %s52
      %s54 = sphi 0, %s52
      %s55 = sphi 0, %s54
      %s69 = sphi 0, %s55
      %s73 = sphi 0, %s73
      %s75 = sphi 0, %s73
      %s76 = sphi 0, %s75
      %s90 = sphi 0, %s76
      %s94 = sphi 0, %s94
      %s96 = sphi 0, %s94
      %s97 = sphi 0, %s96
      %s111 = sphi 0, %s97
      %s115 = sphi 0, %s115
      %s117 = sphi 0, %s115
      %s118 = sphi 0, %s117
      %s132 = sphi 0, %s118
      %s136 = sphi 0, %s136
      %s138 = sphi 0, %s136
      %s139 = sphi 0, %s138
      %s153 = sphi 0, %s139
      %s157 = sphi 0, %s157
      %s159 = sphi 0, %s157
      %s160 = sphi 0, %s159
      %s174 = sphi 0, %s160
      %s178 = sphi 0, %s178
      %s180 = sphi 0, %s178
      %s181 = sphi 0, %s180
      %s195 = sphi 0, %s181
      %s199 = sphi 0, %s199
      %s201 = sphi 0, %s199
      %s202 = sphi 0, %s201
      %s216 = sphi 0, %s202
      %s222 = sphi 0, %s224
      %s225 = sphi 0, %s222
      %s226 = sphi 0, %s225
      %s242 = sphi 0, %s226
    $region4: #{encoder_forward.1} parent=1 // loop_header_branch
      %21 = sbr.rel (%p19) target = $region8
    $region5: #{encoder_forward.1} parent=1 // loop_body
      %s23 = ssub.s32 %s18, 1
      %s24 = ssub.s32 %s18, 2
      %s25 = sadd.s32 %s18, 1
      %s26 = ssub.s32 %s18, %s25
      %p27 = scmp.eq.s32.totalorder %s26, 0
      %s29 = sadd.s32 %s28, 1
      %s30 = scalar_select %p27, %s28, %s29
      %p33 = pneg %p27
      %p34 = scmp.eq.s32.totalorder %s18, 1
      %p35 = por %p33, %p34
      %p36 = scmp.ne.s32.totalorder %s28, %s31
      %p37 = scmp.eq.s32.totalorder %s18, 0
      %p38 = por %p36, %p37
      %p39 = scmp.ne.s32.totalorder %s28, %s31
      %p40 = scmp.eq.s32.totalorder %s23, 1
      %p41 = por %p39, %p40
      %p42 = scmp.ne.s32.totalorder %s31, %s32
      %p43 = scmp.eq.s32.totalorder %s23, 0
      %p44 = por %p42, %p43
      %p45 = scmp.ne.s32.totalorder %s31, %s32
      %p46 = scmp.eq.s32.totalorder %s24, 1
      %p47 = por %p45, %p46
      %p49 = scmp.ne.s32.totalorder %s32, %s48
      %p50 = scmp.eq.s32.totalorder %s24, 0
      %p51 = por %p49, %p50
      %s53 = sadd.s32 %s52, 1
      %p56 = scmp.eq.s32.totalorder %s18, 1
      %p57 = scmp.ne.s32.totalorder %s52, %s54
      %p58 = scmp.eq.s32.totalorder %s18, 0
      %p59 = por %p57, %p58
      %p60 = scmp.ne.s32.totalorder %s52, %s54
      %p61 = scmp.eq.s32.totalorder %s23, 1
      %p62 = por %p60, %p61
      %p63 = scmp.ne.s32.totalorder %s54, %s55
      %p64 = scmp.eq.s32.totalorder %s23, 0
      %p65 = por %p63, %p64
      %p66 = scmp.ne.s32.totalorder %s54, %s55
      %p67 = scmp.eq.s32.totalorder %s24, 1
      %p68 = por %p66, %p67
      %p70 = scmp.ne.s32.totalorder %s55, %s69
      %p71 = scmp.eq.s32.totalorder %s24, 0
      %p72 = por %p70, %p71
      %s74 = sadd.s32 %s73, 1
      %p77 = scmp.eq.s32.totalorder %s18, 1
      %p78 = scmp.ne.s32.totalorder %s73, %s75
      %p79 = scmp.eq.s32.totalorder %s18, 0
      %p80 = por %p78, %p79
      %p81 = scmp.ne.s32.totalorder %s73, %s75
      %p82 = scmp.eq.s32.totalorder %s23, 1
      %p83 = por %p81, %p82
      %p84 = scmp.ne.s32.totalorder %s75, %s76
      %p85 = scmp.eq.s32.totalorder %s23, 0
      %p86 = por %p84, %p85
      %p87 = scmp.ne.s32.totalorder %s75, %s76
      %p88 = scmp.eq.s32.totalorder %s24, 1
      %p89 = por %p87, %p88
      %p91 = scmp.ne.s32.totalorder %s76, %s90
      %p92 = scmp.eq.s32.totalorder %s24, 0
      %p93 = por %p91, %p92
      %s95 = sadd.s32 %s94, 1
      %p98 = scmp.eq.s32.totalorder %s18, 1
      %p99 = scmp.ne.s32.totalorder %s94, %s96
      %p100 = scmp.eq.s32.totalorder %s18, 0
      %p101 = por %p99, %p100
      %p102 = scmp.ne.s32.totalorder %s94, %s96
      %p103 = scmp.eq.s32.totalorder %s23, 1
      %p104 = por %p102, %p103
      %p105 = scmp.ne.s32.totalorder %s96, %s97
      %p106 = scmp.eq.s32.totalorder %s23, 0
      %p107 = por %p105, %p106
      %p108 = scmp.ne.s32.totalorder %s96, %s97
      %p109 = scmp.eq.s32.totalorder %s24, 1
      %p110 = por %p108, %p109
      %p112 = scmp.ne.s32.totalorder %s97, %s111
      %p113 = scmp.eq.s32.totalorder %s24, 0
      %p114 = por %p112, %p113
      %s116 = sadd.s32 %s115, 1
      %p119 = scmp.eq.s32.totalorder %s18, 1
      %p120 = scmp.ne.s32.totalorder %s115, %s117
      %p121 = scmp.eq.s32.totalorder %s18, 0
      %p122 = por %p120, %p121
      %p123 = scmp.ne.s32.totalorder %s115, %s117
      %p124 = scmp.eq.s32.totalorder %s23, 1
      %p125 = por %p123, %p124
      %p126 = scmp.ne.s32.totalorder %s117, %s118
      %p127 = scmp.eq.s32.totalorder %s23, 0
      %p128 = por %p126, %p127
      %p129 = scmp.ne.s32.totalorder %s117, %s118
      %p130 = scmp.eq.s32.totalorder %s24, 1
      %p131 = por %p129, %p130
      %p133 = scmp.ne.s32.totalorder %s118, %s132
      %p134 = scmp.eq.s32.totalorder %s24, 0
      %p135 = por %p133, %p134
      %s137 = sadd.s32 %s136, 1
      %p140 = scmp.eq.s32.totalorder %s18, 1
      %p141 = scmp.ne.s32.totalorder %s136, %s138
      %p142 = scmp.eq.s32.totalorder %s18, 0
      %p143 = por %p141, %p142
      %p144 = scmp.ne.s32.totalorder %s136, %s138
      %p145 = scmp.eq.s32.totalorder %s23, 1
      %p146 = por %p144, %p145
      %p147 = scmp.ne.s32.totalorder %s138, %s139
      %p148 = scmp.eq.s32.totalorder %s23, 0
      %p149 = por %p147, %p148
      %p150 = scmp.ne.s32.totalorder %s138, %s139
      %p151 = scmp.eq.s32.totalorder %s24, 1
      %p152 = por %p150, %p151
      %p154 = scmp.ne.s32.totalorder %s139, %s153
      %p155 = scmp.eq.s32.totalorder %s24, 0
      %p156 = por %p154, %p155
      %s158 = sadd.s32 %s157, 1
      %p161 = scmp.eq.s32.totalorder %s18, 1
      %p162 = scmp.ne.s32.totalorder %s157, %s159
      %p163 = scmp.eq.s32.totalorder %s18, 0
      %p164 = por %p162, %p163
      %p165 = scmp.ne.s32.totalorder %s157, %s159
      %p166 = scmp.eq.s32.totalorder %s23, 1
      %p167 = por %p165, %p166
      %p168 = scmp.ne.s32.totalorder %s159, %s160
      %p169 = scmp.eq.s32.totalorder %s23, 0
      %p170 = por %p168, %p169
      %p171 = scmp.ne.s32.totalorder %s159, %s160
      %p172 = scmp.eq.s32.totalorder %s24, 1
      %p173 = por %p171, %p172
      %p175 = scmp.ne.s32.totalorder %s160, %s174
      %p176 = scmp.eq.s32.totalorder %s24, 0
      %p177 = por %p175, %p176
      %s179 = sadd.s32 %s178, 1
      %p182 = scmp.eq.s32.totalorder %s18, 1
      %p183 = scmp.ne.s32.totalorder %s178, %s180
      %p184 = scmp.eq.s32.totalorder %s18, 0
      %p185 = por %p183, %p184
      %p186 = scmp.ne.s32.totalorder %s178, %s180
      %p187 = scmp.eq.s32.totalorder %s23, 1
      %p188 = por %p186, %p187
      %p189 = scmp.ne.s32.totalorder %s180, %s181
      %p190 = scmp.eq.s32.totalorder %s23, 0
      %p191 = por %p189, %p190
      %p192 = scmp.ne.s32.totalorder %s180, %s181
      %p193 = scmp.eq.s32.totalorder %s24, 1
      %p194 = por %p192, %p193
      %p196 = scmp.ne.s32.totalorder %s181, %s195
      %p197 = scmp.eq.s32.totalorder %s24, 0
      %p198 = por %p196, %p197
      %s200 = sadd.s32 %s199, 1
      %p203 = scmp.eq.s32.totalorder %s18, 1
      %p204 = scmp.ne.s32.totalorder %s199, %s201
      %p205 = scmp.eq.s32.totalorder %s18, 0
      %p206 = por %p204, %p205
      %p207 = scmp.ne.s32.totalorder %s199, %s201
      %p208 = scmp.eq.s32.totalorder %s23, 1
      %p209 = por %p207, %p208
      %p210 = scmp.ne.s32.totalorder %s201, %s202
      %p211 = scmp.eq.s32.totalorder %s23, 0
      %p212 = por %p210, %p211
      %p213 = scmp.ne.s32.totalorder %s201, %s202
      %p214 = scmp.eq.s32.totalorder %s24, 1
      %p215 = por %p213, %p214
      %p217 = scmp.ne.s32.totalorder %s202, %s216
      %p218 = scmp.eq.s32.totalorder %s24, 0
      %p219 = por %p217, %p218
      %s220 = ssub.s32 %s18, %s25
      %p221 = scmp.eq.s32.totalorder %s220, 0
      %s223 = sadd.s32 %s222, 1
      %s224 = scalar_select %p221, %s222, %s223
      %p227 = pneg %p221
      %p228 = scmp.eq.s32.totalorder %s18, 1
      %p229 = por %p227, %p228
      %p230 = scmp.ne.s32.totalorder %s222, %s225
      %p231 = scmp.eq.s32.totalorder %s18, 0
      %p232 = por %p230, %p231
      %p233 = scmp.ne.s32.totalorder %s222, %s225
      %p234 = scmp.eq.s32.totalorder %s23, 1
      %p235 = por %p233, %p234
      %p236 = scmp.ne.s32.totalorder %s225, %s226
      %p237 = scmp.eq.s32.totalorder %s23, 0
      %p238 = por %p236, %p237
      %p239 = scmp.ne.s32.totalorder %s225, %s226
      %p240 = scmp.eq.s32.totalorder %s24, 1
      %p241 = por %p239, %p240
      %p243 = scmp.ne.s32.totalorder %s226, %s242
      %p244 = scmp.eq.s32.totalorder %s24, 0
      %p245 = por %p243, %p244
      %p246 = scmp.le.s32.totalorder 1, %s18
      %p247 = scmp.lt.s32.totalorder %s18, 3
      %p248 = pnand %p246, %p247
      %p249 = pneg %p248
      // Predicated region
      $region9: #{encoder_forward.1} parent=5 // pred_check
        _
      $region10: #{encoder_forward.1} parent=5 // pred_check_branch
        %251 = sbr.rel (%p248) target = $region12
      $region11: #{encoder_forward.1} parent=5 // pred_region
        %s252 = ssub.s32 %s18, 1
        // Predicated region
        $region13: #{encoder_forward.1} parent=11 // pred_check
          %p253 = pneg %p65
        $region14: #{encoder_forward.1} parent=11 // pred_check_branch
          %255 = sbr.rel (%p253) target = $region16
        $region15: #{encoder_forward.1} parent=11 // pred_region
          _
        $region16: #{encoder_forward.1} parent=11 // pred_fallthru
          _
        // Predicated region
        $region17: #{encoder_forward.1} parent=11 // pred_check
          %p256 = pneg %p86
        $region18: #{encoder_forward.1} parent=11 // pred_check_branch
          %258 = sbr.rel (%p256) target = $region20
        $region19: #{encoder_forward.1} parent=11 // pred_region
          _
        $region20: #{encoder_forward.1} parent=11 // pred_fallthru
          _
        // Predicated region
        $region21: #{encoder_forward.1} parent=11 // pred_check
          %p259 = pneg %p107
        $region22: #{encoder_forward.1} parent=11 // pred_check_branch
          %261 = sbr.rel (%p259) target = $region24
        $region23: #{encoder_forward.1} parent=11 // pred_region
          _
        $region24: #{encoder_forward.1} parent=11 // pred_fallthru
          _
        // Predicated region
        $region25: #{encoder_forward.1} parent=11 // pred_check
          %p262 = pneg %p128
        $region26: #{encoder_forward.1} parent=11 // pred_check_branch
          %264 = sbr.rel (%p262) target = $region28
        $region27: #{encoder_forward.1} parent=11 // pred_region
          _
        $region28: #{encoder_forward.1} parent=11 // pred_fallthru
          _
        // Predicated region
        $region29: #{encoder_forward.1} parent=11 // pred_check
          %p265 = pneg %p149
        $region30: #{encoder_forward.1} parent=11 // pred_check_branch
          %267 = sbr.rel (%p265) target = $region32
        $region31: #{encoder_forward.1} parent=11 // pred_region
          _
        $region32: #{encoder_forward.1} parent=11 // pred_fallthru
          _
        // Predicated region
        $region33: #{encoder_forward.1} parent=11 // pred_check
          %p268 = pneg %p170
        $region34: #{encoder_forward.1} parent=11 // pred_check_branch
          %270 = sbr.rel (%p268) target = $region36
        $region35: #{encoder_forward.1} parent=11 // pred_region
          _
        $region36: #{encoder_forward.1} parent=11 // pred_fallthru
          _
        // Predicated region
        $region37: #{encoder_forward.1} parent=11 // pred_check
          %p271 = pneg %p191
        $region38: #{encoder_forward.1} parent=11 // pred_check_branch
          %273 = sbr.rel (%p271) target = $region40
        $region39: #{encoder_forward.1} parent=11 // pred_region
          _
        $region40: #{encoder_forward.1} parent=11 // pred_fallthru
          _
        // Predicated region
        $region41: #{encoder_forward.1} parent=11 // pred_check
          %p274 = pneg %p212
        $region42: #{encoder_forward.1} parent=11 // pred_check_branch
          %276 = sbr.rel (%p274) target = $region44
        $region43: #{encoder_forward.1} parent=11 // pred_region
          _
        $region44: #{encoder_forward.1} parent=11 // pred_fallthru
          _
      $region12: #{encoder_forward.1} parent=5 // pred_fallthru
        _
      %p277 = scmp.lt.s32.totalorder %s18, 2
      // Predicated region
      $region45: #{encoder_forward.1} parent=5 // pred_check
        %p278 = pneg %p277
      $region46: #{encoder_forward.1} parent=5 // pred_check_branch
        %280 = sbr.rel (%p278) target = $region48
      $region47: #{encoder_forward.1} parent=5 // pred_region
        // Predicated region
        $region49: #{encoder_forward.1} parent=47 // pred_check
          %p281 = pneg %p38
        $region50: #{encoder_forward.1} parent=47 // pred_check_branch
          %283 = sbr.rel (%p281) target = $region52
        $region51: #{encoder_forward.1} parent=47 // pred_region
          %p284 = scmp.lt.s32.totalorder %s18, 1
          %s285 = scalar_select %p284, %s18, 1
          %s286 = smul.addr %s285, 8
          %s287 = smul.addr %s286, 4
          %s288 = scalar_lea.vmem %s0, %s287
        $region52: #{encoder_forward.1} parent=47 // pred_fallthru
          _
      $region48: #{encoder_forward.1} parent=5 // pred_fallthru
        _
      %p289 = scmp.le.s32.totalorder 1, %s18
      %p290 = scmp.lt.s32.totalorder %s18, 3
      %p291 = pnand %p289, %p290
      %p292 = pneg %p291
      // Predicated region
      $region53: #{encoder_forward.1} parent=5 // pred_check
        _
      $region54: #{encoder_forward.1} parent=5 // pred_check_branch
        %294 = sbr.rel (%p291) target = $region56
      $region55: #{encoder_forward.1} parent=5 // pred_region
        %s295 = ssub.s32 %s18, 1
        %p296 = scmp.lt.s32.totalorder %s23, 1
        %s297 = scalar_select %p296, %s23, 1
        %s298 = smul.addr %s297, 8
        %s299 = smul.addr %s298, 4
        %s300 = scalar_lea.vmem %s0, %s299
        %p301 = pneg %p44
        %p302 = pneg %p41
        %p303 = pneg %p65
        %p304 = pneg %p62
        %p305 = pneg %p86
        %p306 = pneg %p83
        %p307 = pneg %p107
        %p308 = pneg %p104
        %p309 = pneg %p128
        %p310 = pneg %p125
        %p311 = pneg %p149
        %p312 = pneg %p146
        %p313 = pneg %p170
        %p314 = pneg %p167
        %p315 = pneg %p191
        %p316 = pneg %p188
        %p317 = pneg %p212
        %p318 = pneg %p209
        %p319 = pneg %p238
        %p320 = pneg %p235
        %s321 = sand.u32 %s225, 1
        %s322 = scalar_lea.sflag [#allocation6], %s321
        %s323 = sand.u32 %s225, 1
        %s324 = smul.addr %s323, 16
        %s325 = scalar_lea.vmem [#allocation5], %s324
        %p326 = scmp.lt.s32.totalorder %s23, 1
        %s327 = scalar_select %p326, %s23, 1
        %s328 = smul.addr %s327, 8
        %s329 = smul.addr %s328, 4
        %s330 = scalar_lea.vmem %s0, %s329
        %v332 = vld [vmem:[%s330] sm:$0xf]
        %v333 = vld [vmem:[%s330 + $0x4] sm:$0xf]
        %v334 = vld [vmem:[%s330 + $0x8] sm:$0xf]
        %v335 = vld [vmem:[%s330 + $0xc] sm:$0xf]
        %v336 = vld [vmem:[%s330 + $0x10] sm:$0xf]
        %v337 = vld [vmem:[%s330 + $0x14] sm:$0xf]
        %v338 = vld [vmem:[%s330 + $0x18] sm:$0xf]
        %v339 = vld [vmem:[%s330 + $0x1c] sm:$0xf]
        %v340 = vld [vmem:[%s1] sm:$0xf]
        %v341 = vld [vmem:[%s1 + $0x4] sm:$0xf]
        %v342 = vld [vmem:[%s1 + $0x8] sm:$0xf]
        %v343 = vld [vmem:[%s1 + $0xc] sm:$0xf]
        %v344 = vld [vmem:[%s1 + $0x10] sm:$0xf]
        %v345 = vld [vmem:[%s1 + $0x14] sm:$0xf]
        %v346 = vld [vmem:[%s1 + $0x18] sm:$0xf]
        %v347 = vld [vmem:[%s1 + $0x1c] sm:$0xf]
        %v348 = vld [vmem:[%s2] sm:$0x1]
        %v350 = vlaneseq
        %v351 = vshrl.u32 %v350, 7
        %v352 = vsub.s32 0, %v351
        %v353 = vrot.slane %v348, %v352
        %v363 = vunpack.c.l.b16 %v332
        %v364 = vunpack.c.l.b16 %v333
        %v365 = vunpack.c.l.b16 %v334
        %v366 = vunpack.c.l.b16 %v335
        %v367 = vunpack.c.l.b16 %v336
        %v368 = vunpack.c.l.b16 %v337
        %v369 = vunpack.c.l.b16 %v338
        %v370 = vunpack.c.l.b16 %v339
        %v371 = vpack.c.b16 %v364, %v363
        %v372 = vpack.c.b16 %v366, %v365
        %v373 = vpack.c.b16 %v368, %v367
        %v374 = vpack.c.b16 %v370, %v369
        %v383 = vunpack.c.l.b16 %v340
        %v384 = vunpack.c.l.b16 %v341
        %v385 = vunpack.c.l.b16 %v342
        %v386 = vunpack.c.l.b16 %v343
        %v387 = vunpack.c.l.b16 %v344
        %v388 = vunpack.c.l.b16 %v345
        %v389 = vunpack.c.l.b16 %v346
        %v390 = vunpack.c.l.b16 %v347
        %v391 = vpack.c.b16 %v384, %v383
        %v392 = vpack.c.b16 %v386, %v385
        %v393 = vpack.c.b16 %v388, %v387
        %v394 = vpack.c.b16 %v390, %v389
        %vm399 = vcmask 523264
        %v401 = vsel %vm399, %v371, 0
        %v404 = vsel %vm399, %v372, 0
        %v407 = vsel %vm399, %v373, 0
        %v410 = vsel %vm399, %v374, 0
        %412 = vmatprep.subr.bf16.mxu0 0
        %413 = vmatpush1.bf16.msra.mxu0 %v391
        %414 = vmatprep.subr.bf16.mxu0 0
        %415 = vmatpush1.bf16.msra.mxu0 %v392
        %416 = vmatprep.subr.bf16.mxu0 0
        %417 = vmatpush1.bf16.msra.mxu0 %v393
        %418 = vmatprep.subr.bf16.mxu0 0
        %419 = vmatpush1.bf16.msra.mxu0 %v394
        %420 = vmatprep.subr.bf16.mxu0 0
        %421 = vmatpush1.bf16.msra.mxu0 0
        %422 = vmatprep.subr.bf16.mxu0 0
        %423 = vmatpush1.bf16.msra.mxu0 0
        %424 = vmatprep.subr.bf16.mxu0 0
        %425 = vmatpush1.bf16.msra.mxu0 0
        %426 = vmatprep.subr.bf16.mxu0 0
        %427 = vmatpush1.bf16.msra.mxu0 0
        %428 = vmatprep.subr.bf16.mxu0 0
        %429 = vmatpush1.bf16.msra.mxu0 0
        %430 = vmatprep.subr.bf16.mxu0 0
        %431 = vmatpush1.bf16.msra.mxu0 0
        %432 = vmatprep.subr.bf16.mxu0 0
        %433 = vmatpush1.bf16.msra.mxu0 0
        %434 = vmatprep.subr.bf16.mxu0 0
        %435 = vmatpush1.bf16.msra.mxu0 0
        %436 = vmatprep.subr.bf16.mxu0 0
        %437 = vmatpush1.bf16.msra.mxu0 0
        %438 = vmatprep.subr.bf16.mxu0 0
        %439 = vmatpush1.bf16.msra.mxu0 0
        %440 = vmatprep.subr.bf16.mxu0 0
        %441 = vmatpush1.bf16.msra.mxu0 0
        %442 = vmatprep.subr.bf16.mxu0 0
        %443 = vmatpush1.bf16.msra.mxu0 0
        %444 = vmatprep.mubr.bf16.mxu0 0
        %445 = vmatmul.mubr.bf16.gmra.mrb[0].mxu0 %v401
        %v446 = vpop.f32.mrb[0].mxu0
        %v447 = vadd.f32 %v353, %v446
        %v448 = vpop.f32.mrb[0].mxu0
        %v449 = vpop.f32.mrb[0].mxu0
        %v450 = vadd.f32 %v353, %v449
        %v451 = vpop.f32.mrb[0].mxu0
        %452 = vmatprep.mubr.bf16.mxu0 0
        %453 = vmatmul.mubr.bf16.gmra.mrb[0].mxu0 %v404
        %v454 = vpop.f32.mrb[0].mxu0
        %v455 = vadd.f32 %v353, %v454
        %v456 = vpop.f32.mrb[0].mxu0
        %v457 = vpop.f32.mrb[0].mxu0
        %v458 = vadd.f32 %v353, %v457
        %v459 = vpop.f32.mrb[0].mxu0
        %460 = vmatprep.mubr.bf16.mxu0 0
        %461 = vmatmul.mubr.bf16.gmra.mrb[0].mxu0 %v407
        %v462 = vpop.f32.mrb[0].mxu0
        %v463 = vadd.f32 %v353, %v462
        %v464 = vpop.f32.mrb[0].mxu0
        %v465 = vpop.f32.mrb[0].mxu0
        %v466 = vadd.f32 %v353, %v465
        %v467 = vpop.f32.mrb[0].mxu0
        %468 = vmatprep.mubr.bf16.mxu0 0
        %469 = vmatmul.mubr.bf16.gmra.mrb[0].mxu0 %v410
        %v470 = vpop.f32.mrb[0].mxu0
        %v471 = vadd.f32 %v353, %v470
        %v472 = vpop.f32.mrb[0].mxu0
        %v473 = vpop.f32.mrb[0].mxu0
        %v474 = vadd.f32 %v353, %v473
        %v475 = vpop.f32.mrb[0].mxu0
        %476 = vdwg.mxu0
        %v477 = vmax.f32 %v447, 0.0
        %v478 = vmax.f32 %v450, 0.0
        %v479 = vmax.f32 %v455, 0.0
        %v480 = vmax.f32 %v458, 0.0
        %v481 = vmax.f32 %v463, 0.0
        %v482 = vmax.f32 %v466, 0.0
        %v483 = vmax.f32 %v471, 0.0
        %v484 = vmax.f32 %v474, 0.0
        %vm485 = vcmask 520192
        %486 = vst.msk [vmem:[#allocation2] sm:$0x1f] %vm485, 0.0
        %487 = vst.msk [vmem:[#allocation2 + $0x8] sm:$0x1f] %vm485, 0.0
        %488 = vst.msk [vmem:[#allocation2 + $0x10] sm:$0x1f] %vm485, 0.0
        %489 = vst.msk [vmem:[#allocation2 + $0x18] sm:$0x1f] %vm485, 0.0
        %490 = vst.msk [vmem:[#allocation2 + $0x20] sm:$0x1f] %vm485, 0.0
        %s491 = scalar_lea.vmem [#allocation2], 8
        %vm492 = vcmask 125952
        %493 = vst.msk [vmem:[%s491 + $0x1] sm:$0xf] %vm492, %v477
        %s494 = scalar_lea.vmem [#allocation2], 16
        %vm495 = vcmask 130052
        %496 = vst.msk [vmem:[%s494 - $0x3] sm:$0xf0] %vm495, %v477
        %s497 = scalar_lea.vmem [#allocation2], 24
        %498 = vst.msk [vmem:[%s497 + $0x1] sm:$0xf] %vm492, %v478
        %s499 = scalar_lea.vmem [#allocation2], 32
        %500 = vst.msk [vmem:[%s499 - $0x3] sm:$0xf0] %vm495, %v478
        %502 = vrot.lane.b32.xlu0 %v479, 16
        %v503 = vpop.permute.xlu0 %502
        %vm505 = vcmask 257152
        %506 = vst.msk [vmem:[%s491] sm:$0xf] %vm505, %v503
        %vm507 = vcmask 261252
        %508 = vst.msk [vmem:[%s494 - $0x4] sm:$0xf0] %vm507, %v503
        %510 = vrot.lane.b32.xlu0 %v480, 16
        %v511 = vpop.permute.xlu0 %510
        %513 = vst.msk [vmem:[%s497] sm:$0xf] %vm505, %v511
        %514 = vst.msk [vmem:[%s499 - $0x4] sm:$0xf0] %vm507, %v511
        %516 = vrot.lane.b32.xlu0 %v481, 32
        %v517 = vpop.permute.xlu0 %516
        %vm519 = vcmask 388352
        %520 = vst.msk [vmem:[#allocation2 + $0x1] sm:$0xf] %vm519, %v517
        %vm521 = vcmask 392452
        %522 = vst.msk [vmem:[%s491 - $0x3] sm:$0xf0] %vm521, %v517
        %524 = vrot.lane.b32.xlu0 %v482, 32
        %v525 = vpop.permute.xlu0 %524
        %527 = vst.msk [vmem:[%s494 + $0x1] sm:$0xf] %vm519, %v525
        %528 = vst.msk [vmem:[%s497 - $0x3] sm:$0xf0] %vm521, %v525
        %530 = vrot.lane.b32.xlu0 %v483, 48
        %v531 = vpop.permute.xlu0 %530
        %vm533 = vcmask 519552
        %534 = vst.msk [vmem:[#allocation2] sm:$0xf] %vm533, %v531
        %vm535 = vcmask 523652
        %536 = vst.msk [vmem:[%s491 - $0x4] sm:$0xf0] %vm535, %v531
        %538 = vrot.lane.b32.xlu0 %v484, 48
        %v539 = vpop.permute.xlu0 %538
        %541 = vst.msk [vmem:[%s494] sm:$0xf] %vm533, %v539
        %542 = vst.msk [vmem:[%s497 - $0x4] sm:$0xf0] %vm535, %v539
        %v543 = vld [vmem:[#allocation2] sm:$0xf]
        %v544 = vld [vmem:[#allocation2 + $0x8] sm:$0xf]
        %v545 = vld [vmem:[#allocation2 + $0x10] sm:$0xf]
        %v546 = vld [vmem:[#allocation2 + $0x18] sm:$0xf]
        %v551 = vcombine.low %v543, %v544
        %v552 = vcombine.low %v545, %v546
        %555 = vst.msk [vmem:[#allocation4] sm:$0xff] %vm399, %v551
        %556 = vst.msk [vmem:[#allocation4 + $0x18] sm:$0xff] %vm399, %v552
        %v557 = vld [vmem:[#allocation2 + $0x1] sm:$0xf]
        %v558 = vld [vmem:[#allocation2 + $0x9] sm:$0xf]
        %v559 = vld [vmem:[#allocation2 + $0x11] sm:$0xf]
        %v560 = vld [vmem:[#allocation2 + $0x19] sm:$0xf]
        %v565 = vcombine.low %v557, %v558
        %v566 = vcombine.low %v559, %v560
        %567 = vrot.lane.b32.xlu0 %v565, 64
        %v568 = vpop.permute.xlu0 %567
        %569 = vrot.lane.b32.xlu0 %v566, 64
        %v570 = vpop.permute.xlu0 %569
        %vm573 = vcmask 1048064
        %574 = vst.msk [vmem:[#allocation4] sm:$0xff] %vm573, %v568
        %575 = vst.msk [vmem:[#allocation4 + $0x18] sm:$0xff] %vm573, %v570
        %v576 = vld [vmem:[%s491] sm:$0xf]
        %v577 = vld [vmem:[%s491 + $0x8] sm:$0xf]
        %v578 = vld [vmem:[%s491 + $0x10] sm:$0xf]
        %v579 = vld [vmem:[%s491 + $0x18] sm:$0xf]
        %v584 = vcombine.low %v576, %v577
        %v585 = vcombine.low %v578, %v579
        %588 = vst.msk [vmem:[#allocation4 + $0x8] sm:$0xff] %vm399, %v584
        %589 = vst.msk [vmem:[#allocation4 + $0x20] sm:$0xff] %vm399, %v585
        %v590 = vld [vmem:[%s491 + $0x1] sm:$0xf]
        %v591 = vld [vmem:[%s491 + $0x9] sm:$0xf]
        %v592 = vld [vmem:[%s491 + $0x11] sm:$0xf]
        %v593 = vld [vmem:[%s491 + $0x19] sm:$0xf]
        %v598 = vcombine.low %v590, %v591
        %v599 = vcombine.low %v592, %v593
        %600 = vrot.lane.b32.xlu0 %v598, 64
        %v601 = vpop.permute.xlu0 %600
        %602 = vrot.lane.b32.xlu0 %v599, 64
        %v603 = vpop.permute.xlu0 %602
        %606 = vst.msk [vmem:[#allocation4 + $0x8] sm:$0xff] %vm573, %v601
        %607 = vst.msk [vmem:[#allocation4 + $0x20] sm:$0xff] %vm573, %v603
        %v608 = vld [vmem:[#allocation4] sm:$0xff]
        %v609 = vld [vmem:[#allocation4 + $0x8] sm:$0xff]
        %v610 = vld [vmem:[#allocation4 + $0x18] sm:$0xff]
        %v611 = vld [vmem:[#allocation4 + $0x20] sm:$0xff]
        %v612 = vpack.c.bf16 %v610, %v608
        %v613 = vpack.c.bf16 %v611, %v609
        %v614 = vld [vmem:[%s3] sm:$0xf]
        %v615 = vld [vmem:[%s3 + $0x4] sm:$0xf]
        %v616 = vld [vmem:[%s3 + $0x8] sm:$0xf]
        %v617 = vld [vmem:[%s3 + $0xc] sm:$0xf]
        %v618 = vld [vmem:[%s3 + $0x10] sm:$0xf]
        %v619 = vld [vmem:[%s3 + $0x14] sm:$0xf]
        %v620 = vld [vmem:[%s3 + $0x18] sm:$0xf]
        %v621 = vld [vmem:[%s3 + $0x1c] sm:$0xf]
        %v622 = vld [vmem:[%s3 + $0x20] sm:$0xf]
        %v623 = vld [vmem:[%s3 + $0x24] sm:$0xf]
        %v624 = vld [vmem:[%s3 + $0x28] sm:$0xf]
        %v625 = vld [vmem:[%s3 + $0x2c] sm:$0xf]
        %v626 = vld [vmem:[%s3 + $0x30] sm:$0xf]
        %v627 = vld [vmem:[%s3 + $0x34] sm:$0xf]
        %v628 = vld [vmem:[%s3 + $0x38] sm:$0xf]
        %v629 = vld [vmem:[%s3 + $0x3c] sm:$0xf]
        %v630 = vld [vmem:[%s3 + $0x40] sm:$0xf]
        %v631 = vld [vmem:[%s3 + $0x44] sm:$0xf]
        %v632 = vld [vmem:[%s3 + $0x48] sm:$0xf]
        %v633 = vld [vmem:[%s3 + $0x4c] sm:$0xf]
        %v634 = vld [vmem:[%s3 + $0x50] sm:$0xf]
        %v635 = vld [vmem:[%s3 + $0x54] sm:$0xf]
        %v636 = vld [vmem:[%s3 + $0x58] sm:$0xf]
        %v637 = vld [vmem:[%s3 + $0x5c] sm:$0xf]
        %v638 = vld [vmem:[%s3 + $0x60] sm:$0xf]
        %v639 = vld [vmem:[%s3 + $0x64] sm:$0xf]
        %v640 = vld [vmem:[%s3 + $0x68] sm:$0xf]
        %v641 = vld [vmem:[%s3 + $0x6c] sm:$0xf]
        %v642 = vld [vmem:[%s3 + $0x70] sm:$0xf]
        %v643 = vld [vmem:[%s3 + $0x74] sm:$0xf]
        %v644 = vld [vmem:[%s3 + $0x78] sm:$0xf]
        %v645 = vld [vmem:[%s3 + $0x7c] sm:$0xf]
        %v646 = vld [vmem:[%s4] sm:$0x1]
        %v648 = vlaneseq
        %v649 = vshrl.u32 %v648, 7
        %v650 = vsub.s32 0, %v649
        %v651 = vrot.slane %v646, %v650
        %v685 = vunpack.c.l.b16 %v614
        %v686 = vunpack.c.l.b16 %v615
        %v687 = vunpack.c.l.b16 %v616
        %v688 = vunpack.c.l.b16 %v617
        %v689 = vunpack.c.l.b16 %v618
        %v690 = vunpack.c.l.b16 %v619
        %v691 = vunpack.c.l.b16 %v620
        %v692 = vunpack.c.l.b16 %v621
        %v693 = vunpack.c.l.b16 %v622
        %v694 = vunpack.c.l.b16 %v623
        %v695 = vunpack.c.l.b16 %v624
        %v696 = vunpack.c.l.b16 %v625
        %v697 = vunpack.c.l.b16 %v626
        %v698 = vunpack.c.l.b16 %v627
        %v699 = vunpack.c.l.b16 %v628
        %v700 = vunpack.c.l.b16 %v629
        %v701 = vunpack.c.l.b16 %v630
        %v702 = vunpack.c.l.b16 %v631
        %v703 = vunpack.c.l.b16 %v632
        %v704 = vunpack.c.l.b16 %v633
        %v705 = vunpack.c.l.b16 %v634
        %v706 = vunpack.c.l.b16 %v635
        %v707 = vunpack.c.l.b16 %v636
        %v708 = vunpack.c.l.b16 %v637
        %v709 = vunpack.c.l.b16 %v638
        %v710 = vunpack.c.l.b16 %v639
        %v711 = vunpack.c.l.b16 %v640
        %v712 = vunpack.c.l.b16 %v641
        %v713 = vunpack.c.l.b16 %v642
        %v714 = vunpack.c.l.b16 %v643
        %v715 = vunpack.c.l.b16 %v644
        %v716 = vunpack.c.l.b16 %v645
        %v717 = vpack.c.b16 %v686, %v685
        %v718 = vpack.c.b16 %v688, %v687
        %v719 = vpack.c.b16 %v690, %v689
        %v720 = vpack.c.b16 %v692, %v691
        %v721 = vpack.c.b16 %v694, %v693
        %v722 = vpack.c.b16 %v696, %v695
        %v723 = vpack.c.b16 %v698, %v697
        %v724 = vpack.c.b16 %v700, %v699
        %v725 = vpack.c.b16 %v702, %v701
        %v726 = vpack.c.b16 %v704, %v703
        %v727 = vpack.c.b16 %v706, %v705
        %v728 = vpack.c.b16 %v708, %v707
        %v729 = vpack.c.b16 %v710, %v709
        %v730 = vpack.c.b16 %v712, %v711
        %v731 = vpack.c.b16 %v714, %v713
        %v732 = vpack.c.b16 %v716, %v715
        %749 = vmatprep.subr.bf16.mxu0 0
        %750 = vmatpush1.bf16.msra.mxu0 %v717
        %751 = vmatprep.subr.bf16.mxu0 0
        %752 = vmatpush1.bf16.msra.mxu0 %v718
        %753 = vmatprep.subr.bf16.mxu0 0
        %754 = vmatpush1.bf16.msra.mxu0 %v719
        %755 = vmatprep.subr.bf16.mxu0 0
        %756 = vmatpush1.bf16.msra.mxu0 %v720
        %757 = vmatprep.subr.bf16.mxu0 0
        %758 = vmatpush1.bf16.msra.mxu0 %v721
        %759 = vmatprep.subr.bf16.mxu0 0
        %760 = vmatpush1.bf16.msra.mxu0 %v722
        %761 = vmatprep.subr.bf16.mxu0 0
        %762 = vmatpush1.bf16.msra.mxu0 %v723
        %763 = vmatprep.subr.bf16.mxu0 0
        %764 = vmatpush1.bf16.msra.mxu0 %v724
        %765 = vmatprep.subr.bf16.mxu0 0
        %766 = vmatpush1.bf16.msra.mxu0 %v725
        %767 = vmatprep.subr.bf16.mxu0 0
        %768 = vmatpush1.bf16.msra.mxu0 %v726
        %769 = vmatprep.subr.bf16.mxu0 0
        %770 = vmatpush1.bf16.msra.mxu0 %v727
        %771 = vmatprep.subr.bf16.mxu0 0
        %772 = vmatpush1.bf16.msra.mxu0 %v728
        %773 = vmatprep.subr.bf16.mxu0 0
        %774 = vmatpush1.bf16.msra.mxu0 %v729
        %775 = vmatprep.subr.bf16.mxu0 0
        %776 = vmatpush1.bf16.msra.mxu0 %v730
        %777 = vmatprep.subr.bf16.mxu0 0
        %778 = vmatpush1.bf16.msra.mxu0 %v731
        %779 = vmatprep.subr.bf16.mxu0 0
        %780 = vmatpush1.bf16.msra.mxu0 %v732
        %781 = vmatprep.mubr.bf16.mxu0 %v613
        %782 = vmatmul.mubr.bf16.gmra.mrb[0].mxu0 %v612
        %v783 = vpop.f32.mrb[0].mxu0
        %v784 = vadd.f32 %v651, %v783
        %v785 = vpop.f32.mrb[0].mxu0
        %v786 = vpop.f32.mrb[0].mxu0
        %v787 = vadd.f32 %v651, %v786
        %v788 = vpop.f32.mrb[0].mxu0
        %789 = vdwg.mxu0
        %v790 = vmax.f32 %v784, 0.0
        %v791 = vmax.f32 %v787, 0.0
        %vm792 = vcmask 259072
        %793 = vst.msk [vmem:[#allocation3] sm:$0x3f] %vm792, 0.0
        %794 = vst.msk [vmem:[#allocation3 + $0x8] sm:$0x3f] %vm792, 0.0
        %795 = vst.msk [vmem:[#allocation3 + $0x10] sm:$0x3f] %vm792, 0.0
        %796 = vst.msk [vmem:[#allocation3 + $0x18] sm:$0x3f] %vm792, 0.0
        %797 = vst.msk [vmem:[#allocation3 + $0x20] sm:$0x3f] %vm792, 0.0
        %798 = vst.msk [vmem:[#allocation3 + $0x28] sm:$0x3f] %vm792, 0.0
        %s799 = scalar_lea.vmem [#allocation3], 8
        %vm800 = vcmask 257024
        %801 = vst.msk [vmem:[%s799 + $0x1] sm:$0xf] %vm800, %v790
        %s802 = scalar_lea.vmem [#allocation3], 16
        %vm803 = vcmask 261124
        %804 = vst.msk [vmem:[%s802 - $0x3] sm:$0xf0] %vm803, %v790
        %s805 = scalar_lea.vmem [#allocation3], 24
        %806 = vst.msk [vmem:[%s805 + $0x1] sm:$0xf] %vm800, %v791
        %s807 = scalar_lea.vmem [#allocation3], 32
        %808 = vst.msk [vmem:[%s807 - $0x3] sm:$0xf0] %vm803, %v791
        %v809 = vld [vmem:[%s5] sm:$0xf]
        %v810 = vld [vmem:[%s5 + $0x4] sm:$0xf]
        %v811 = vld [vmem:[%s5 + $0x8] sm:$0xf]
        %v812 = vld [vmem:[%s5 + $0xc] sm:$0xf]
        %v813 = vld [vmem:[%s5 + $0x10] sm:$0xf]
        %v814 = vld [vmem:[%s5 + $0x14] sm:$0xf]
        %v815 = vld [vmem:[%s5 + $0x18] sm:$0xf]
        %v816 = vld [vmem:[%s5 + $0x1c] sm:$0xf]
        %v817 = vld [vmem:[%s5 + $0x20] sm:$0xf]
        %v818 = vld [vmem:[%s5 + $0x24] sm:$0xf]
        %v819 = vld [vmem:[%s5 + $0x28] sm:$0xf]
        %v820 = vld [vmem:[%s5 + $0x2c] sm:$0xf]
        %v821 = vld [vmem:[%s5 + $0x30] sm:$0xf]
        %v822 = vld [vmem:[%s5 + $0x34] sm:$0xf]
        %v823 = vld [vmem:[%s5 + $0x38] sm:$0xf]
        %v824 = vld [vmem:[%s5 + $0x3c] sm:$0xf]
        %v825 = vld [vmem:[%s5 + $0x40] sm:$0xf]
        %v826 = vld [vmem:[%s5 + $0x44] sm:$0xf]
        %v827 = vld [vmem:[%s5 + $0x48] sm:$0xf]
        %v828 = vld [vmem:[%s5 + $0x4c] sm:$0xf]
        %v829 = vld [vmem:[%s5 + $0x50] sm:$0xf]
        %v830 = vld [vmem:[%s5 + $0x54] sm:$0xf]
        %v831 = vld [vmem:[%s5 + $0x58] sm:$0xf]
        %v832 = vld [vmem:[%s5 + $0x5c] sm:$0xf]
        %v833 = vld [vmem:[%s5 + $0x60] sm:$0xf]
        %v834 = vld [vmem:[%s5 + $0x64] sm:$0xf]
        %v835 = vld [vmem:[%s5 + $0x68] sm:$0xf]
        %v836 = vld [vmem:[%s5 + $0x6c] sm:$0xf]
        %v837 = vld [vmem:[%s5 + $0x70] sm:$0xf]
        %v838 = vld [vmem:[%s5 + $0x74] sm:$0xf]
        %v839 = vld [vmem:[%s5 + $0x78] sm:$0xf]
        %v840 = vld [vmem:[%s5 + $0x7c] sm:$0xf]
        %v841 = vld [vmem:[%s5 + $0x80] sm:$0xf]
        %v842 = vld [vmem:[%s5 + $0x84] sm:$0xf]
        %v843 = vld [vmem:[%s5 + $0x88] sm:$0xf]
        %v844 = vld [vmem:[%s5 + $0x8c] sm:$0xf]
        %v845 = vld [vmem:[#allocation3] sm:$0xf]
        %v846 = vld [vmem:[#allocation3 + $0x8] sm:$0xf]
        %v847 = vld [vmem:[#allocation3 + $0x10] sm:$0xf]
        %v848 = vld [vmem:[#allocation3 + $0x18] sm:$0xf]
        %v853 = vcombine.low %v845, %v846
        %v854 = vcombine.low %v847, %v848
        %vm857 = vcmask 261120
        %858 = vst.msk [vmem:[#allocation4] sm:$0xff] %vm857, %v853
        %859 = vst.msk [vmem:[#allocation4 + $0x18] sm:$0xff] %vm857, %v854
        %v860 = vld [vmem:[#allocation3 + $0x1] sm:$0xf]
        %v861 = vld [vmem:[#allocation3 + $0x9] sm:$0xf]
        %v862 = vld [vmem:[#allocation3 + $0x11] sm:$0xf]
        %v863 = vld [vmem:[#allocation3 + $0x19] sm:$0xf]
        %v868 = vcombine.low %v860, %v861
        %v869 = vcombine.low %v862, %v863
        %870 = vrot.lane.b32.xlu0 %v868, 32
        %v871 = vpop.permute.xlu0 %870
        %872 = vrot.lane.b32.xlu0 %v869, 32
        %v873 = vpop.permute.xlu0 %872
        %vm876 = vcmask 523520
        %877 = vst.msk [vmem:[#allocation4] sm:$0xff] %vm876, %v871
        %878 = vst.msk [vmem:[#allocation4 + $0x18] sm:$0xff] %vm876, %v873
        %v879 = vld [vmem:[#allocation3 + $0x2] sm:$0xf]
        %v880 = vld [vmem:[#allocation3 + $0xa] sm:$0xf]
        %v881 = vld [vmem:[#allocation3 + $0x12] sm:$0xf]
        %v882 = vld [vmem:[#allocation3 + $0x1a] sm:$0xf]
        %v887 = vcombine.low %v879, %v880
        %v888 = vcombine.low %v881, %v882
        %889 = vrot.lane.b32.xlu0 %v887, 64
        %v890 = vpop.permute.xlu0 %889
        %891 = vrot.lane.b32.xlu0 %v888, 64
        %v892 = vpop.permute.xlu0 %891
        %vm895 = vcmask 785920
        %896 = vst.msk [vmem:[#allocation4] sm:$0xff] %vm895, %v890
        %897 = vst.msk [vmem:[#allocation4 + $0x18] sm:$0xff] %vm895, %v892
        %v898 = vld [vmem:[%s799] sm:$0xf]
        %v899 = vld [vmem:[%s799 + $0x8] sm:$0xf]
        %v900 = vld [vmem:[%s799 + $0x10] sm:$0xf]
        %v901 = vld [vmem:[%s799 + $0x18] sm:$0xf]
        %v906 = vcombine.low %v898, %v899
        %v907 = vcombine.low %v900, %v901
        %908 = vrot.lane.b32.xlu0 %v906, 96
        %v909 = vpop.permute.xlu0 %908
        %910 = vrot.lane.b32.xlu0 %v907, 96
        %v911 = vpop.permute.xlu0 %910
        %vm914 = vcmask 1048320
        %915 = vst.msk [vmem:[#allocation4] sm:$0xff] %vm914, %v909
        %916 = vst.msk [vmem:[#allocation4 + $0x18] sm:$0xff] %vm914, %v911
        %v917 = vld [vmem:[%s799 + $0x1] sm:$0xf]
        %v918 = vld [vmem:[%s799 + $0x9] sm:$0xf]
        %v919 = vld [vmem:[%s799 + $0x11] sm:$0xf]
        %v920 = vld [vmem:[%s799 + $0x19] sm:$0xf]
        %v925 = vcombine.low %v917, %v918
        %v926 = vcombine.low %v919, %v920
        %929 = vst.msk [vmem:[#allocation4 + $0x8] sm:$0xff] %vm857, %v925
        %930 = vst.msk [vmem:[#allocation4 + $0x20] sm:$0xff] %vm857, %v926
        %v931 = vld [vmem:[%s799 + $0x2] sm:$0xf]
        %v932 = vld [vmem:[%s799 + $0xa] sm:$0xf]
        %v933 = vld [vmem:[%s799 + $0x12] sm:$0xf]
        %v934 = vld [vmem:[%s799 + $0x1a] sm:$0xf]
        %v939 = vcombine.low %v931, %v932
        %v940 = vcombine.low %v933, %v934
        %941 = vrot.lane.b32.xlu0 %v939, 32
        %v942 = vpop.permute.xlu0 %941
        %943 = vrot.lane.b32.xlu0 %v940, 32
        %v944 = vpop.permute.xlu0 %943
        %947 = vst.msk [vmem:[#allocation4 + $0x8] sm:$0xff] %vm876, %v942
        %948 = vst.msk [vmem:[#allocation4 + $0x20] sm:$0xff] %vm876, %v944
        %v949 = vld [vmem:[%s802] sm:$0xf]
        %v950 = vld [vmem:[%s802 + $0x8] sm:$0xf]
        %v951 = vld [vmem:[%s802 + $0x10] sm:$0xf]
        %v952 = vld [vmem:[%s802 + $0x18] sm:$0xf]
        %v957 = vcombine.low %v949, %v950
        %v958 = vcombine.low %v951, %v952
        %959 = vrot.lane.b32.xlu0 %v957, 64
        %v960 = vpop.permute.xlu0 %959
        %961 = vrot.lane.b32.xlu0 %v958, 64
        %v962 = vpop.permute.xlu0 %961
        %965 = vst.msk [vmem:[#allocation4 + $0x8] sm:$0xff] %vm895, %v960
        %966 = vst.msk [vmem:[#allocation4 + $0x20] sm:$0xff] %vm895, %v962
        %v967 = vld [vmem:[%s802 + $0x1] sm:$0xf]
        %v968 = vld [vmem:[%s802 + $0x9] sm:$0xf]
        %v969 = vld [vmem:[%s802 + $0x11] sm:$0xf]
        %v970 = vld [vmem:[%s802 + $0x19] sm:$0xf]
        %v975 = vcombine.low %v967, %v968
        %v976 = vcombine.low %v969, %v970
        %977 = vrot.lane.b32.xlu0 %v975, 96
        %v978 = vpop.permute.xlu0 %977
        %979 = vrot.lane.b32.xlu0 %v976, 96
        %v980 = vpop.permute.xlu0 %979
        %983 = vst.msk [vmem:[#allocation4 + $0x8] sm:$0xff] %vm914, %v978
        %984 = vst.msk [vmem:[#allocation4 + $0x20] sm:$0xff] %vm914, %v980
        %v985 = vld [vmem:[%s802 + $0x2] sm:$0xf]
        %v986 = vld [vmem:[%s802 + $0xa] sm:$0xf]
        %v987 = vld [vmem:[%s802 + $0x12] sm:$0xf]
        %v988 = vld [vmem:[%s802 + $0x1a] sm:$0xf]
        %v993 = vcombine.low %v985, %v986
        %v994 = vcombine.low %v987, %v988
        %997 = vst.msk [vmem:[#allocation4 + $0x10] sm:$0xff] %vm857, %v993
        %998 = vst.msk [vmem:[#allocation4 + $0x28] sm:$0xff] %vm857, %v994
        %v999 = vld [vmem:[#allocation4] sm:$0xff]
        %v1000 = vld [vmem:[#allocation4 + $0x8] sm:$0xff]
        %v1001 = vld [vmem:[#allocation4 + $0x10] sm:$0xff]
        %v1002 = vld [vmem:[#allocation4 + $0x18] sm:$0xff]
        %v1003 = vld [vmem:[#allocation4 + $0x20] sm:$0xff]
        %v1004 = vld [vmem:[#allocation4 + $0x28] sm:$0xff]
        %v1005 = vpack.c.bf16 %v1002, %v999
        %v1006 = vpack.c.bf16 %v1003, %v1000
        %v1007 = vpack.c.bf16 %v1004, %v1001
        %v1008 = vld [vmem:[%s6] sm:$0x1]
        %v1010 = vlaneseq
        %v1011 = vshrl.u32 %v1010, 7
        %v1012 = vsub.s32 0, %v1011
        %v1013 = vrot.slane %v1008, %v1012
        %v1051 = vunpack.c.l.b16 %v809
        %v1052 = vunpack.c.l.b16 %v810
        %v1053 = vunpack.c.l.b16 %v811
        %v1054 = vunpack.c.l.b16 %v812
        %v1055 = vunpack.c.l.b16 %v813
        %v1056 = vunpack.c.l.b16 %v814
        %v1057 = vunpack.c.l.b16 %v815
        %v1058 = vunpack.c.l.b16 %v816
        %v1059 = vunpack.c.l.b16 %v817
        %v1060 = vunpack.c.l.b16 %v818
        %v1061 = vunpack.c.l.b16 %v819
        %v1062 = vunpack.c.l.b16 %v820
        %v1063 = vunpack.c.l.b16 %v821
        %v1064 = vunpack.c.l.b16 %v822
        %v1065 = vunpack.c.l.b16 %v823
        %v1066 = vunpack.c.l.b16 %v824
        %v1067 = vunpack.c.l.b16 %v825
        %v1068 = vunpack.c.l.b16 %v826
        %v1069 = vunpack.c.l.b16 %v827
        %v1070 = vunpack.c.l.b16 %v828
        %v1071 = vunpack.c.l.b16 %v829
        %v1072 = vunpack.c.l.b16 %v830
        %v1073 = vunpack.c.l.b16 %v831
        %v1074 = vunpack.c.l.b16 %v832
        %v1075 = vunpack.c.l.b16 %v833
        %v1076 = vunpack.c.l.b16 %v834
        %v1077 = vunpack.c.l.b16 %v835
        %v1078 = vunpack.c.l.b16 %v836
        %v1079 = vunpack.c.l.b16 %v837
        %v1080 = vunpack.c.l.b16 %v838
        %v1081 = vunpack.c.l.b16 %v839
        %v1082 = vunpack.c.l.b16 %v840
        %v1083 = vunpack.c.l.b16 %v841
        %v1084 = vunpack.c.l.b16 %v842
        %v1085 = vunpack.c.l.b16 %v843
        %v1086 = vunpack.c.l.b16 %v844
        %v1087 = vpack.c.b16 %v1052, %v1051
        %v1088 = vpack.c.b16 %v1054, %v1053
        %v1089 = vpack.c.b16 %v1056, %v1055
        %v1090 = vpack.c.b16 %v1058, %v1057
        %v1091 = vpack.c.b16 %v1060, %v1059
        %v1092 = vpack.c.b16 %v1062, %v1061
        %v1093 = vpack.c.b16 %v1064, %v1063
        %v1094 = vpack.c.b16 %v1066, %v1065
        %v1095 = vpack.c.b16 %v1068, %v1067
        %v1096 = vpack.c.b16 %v1070, %v1069
        %v1097 = vpack.c.b16 %v1072, %v1071
        %v1098 = vpack.c.b16 %v1074, %v1073
        %v1099 = vpack.c.b16 %v1076, %v1075
        %v1100 = vpack.c.b16 %v1078, %v1077
        %v1101 = vpack.c.b16 %v1080, %v1079
        %v1102 = vpack.c.b16 %v1082, %v1081
        %v1103 = vpack.c.b16 %v1084, %v1083
        %v1104 = vpack.c.b16 %v1086, %v1085
        %v1124 = vsel %vm857, %v1007, 0
        %1126 = vmatprep.subr.bf16.mxu0 0
        %1127 = vmatpush1.bf16.msra.mxu0 %v1087
        %1128 = vmatprep.subr.bf16.mxu0 0
        %1129 = vmatpush1.bf16.msra.mxu0 %v1088
        %1130 = vmatprep.subr.bf16.mxu0 0
        %1131 = vmatpush1.bf16.msra.mxu0 %v1089
        %1132 = vmatprep.subr.bf16.mxu0 0
        %1133 = vmatpush1.bf16.msra.mxu0 %v1090
        %1134 = vmatprep.subr.bf16.mxu0 0
        %1135 = vmatpush1.bf16.msra.mxu0 %v1091
        %1136 = vmatprep.subr.bf16.mxu0 0
        %1137 = vmatpush1.bf16.msra.mxu0 %v1092
        %1138 = vmatprep.subr.bf16.mxu0 0
        %1139 = vmatpush1.bf16.msra.mxu0 %v1093
        %1140 = vmatprep.subr.bf16.mxu0 0
        %1141 = vmatpush1.bf16.msra.mxu0 %v1094
        %1142 = vmatprep.subr.bf16.mxu0 0
        %1143 = vmatpush1.bf16.msra.mxu0 %v1095
        %1144 = vmatprep.subr.bf16.mxu0 0
        %1145 = vmatpush1.bf16.msra.mxu0 %v1096
        %1146 = vmatprep.subr.bf16.mxu0 0
        %1147 = vmatpush1.bf16.msra.mxu0 %v1097
        %1148 = vmatprep.subr.bf16.mxu0 0
        %1149 = vmatpush1.bf16.msra.mxu0 %v1098
        %1150 = vmatprep.subr.bf16.mxu0 0
        %1151 = vmatpush1.bf16.msra.mxu0 %v1099
        %1152 = vmatprep.subr.bf16.mxu0 0
        %1153 = vmatpush1.bf16.msra.mxu0 %v1100
        %1154 = vmatprep.subr.bf16.mxu0 0
        %1155 = vmatpush1.bf16.msra.mxu0 %v1101
        %1156 = vmatprep.subr.bf16.mxu0 0
        %1157 = vmatpush1.bf16.msra.mxu0 %v1102
        %1158 = vmatprep.mubr.bf16.mxu0 %v1006
        %1159 = vmatmul.mubr.bf16.gmra.mrb[0].mxu0 %v1005
        %v1160 = vpop.f32.mrb[0].mxu0
        %v1161 = vadd.f32 %v1013, %v1160
        %v1162 = vpop.f32.mrb[0].mxu0
        %v1163 = vpop.f32.mrb[0].mxu0
        %v1164 = vadd.f32 %v1013, %v1163
        %v1165 = vpop.f32.mrb[0].mxu0
        %1166 = vdwg.mxu0
        %1167 = vmatprep.subr.bf16.mxu0 0
        %1168 = vmatpush1.bf16.msra.mxu0 %v1103
        %1169 = vmatprep.subr.bf16.mxu0 0
        %1170 = vmatpush1.bf16.msra.mxu0 %v1104
        %1171 = vmatprep.subr.bf16.mxu0 0
        %1172 = vmatpush1.bf16.msra.mxu0 0
        %1173 = vmatprep.subr.bf16.mxu0 0
        %1174 = vmatpush1.bf16.msra.mxu0 0
        %1175 = vmatprep.subr.bf16.mxu0 0
        %1176 = vmatpush1.bf16.msra.mxu0 0
        %1177 = vmatprep.subr.bf16.mxu0 0
        %1178 = vmatpush1.bf16.msra.mxu0 0
        %1179 = vmatprep.subr.bf16.mxu0 0
        %1180 = vmatpush1.bf16.msra.mxu0 0
        %1181 = vmatprep.subr.bf16.mxu0 0
        %1182 = vmatpush1.bf16.msra.mxu0 0
        %1183 = vmatprep.subr.bf16.mxu0 0
        %1184 = vmatpush1.bf16.msra.mxu0 0
        %1185 = vmatprep.subr.bf16.mxu0 0
        %1186 = vmatpush1.bf16.msra.mxu0 0
        %1187 = vmatprep.subr.bf16.mxu0 0
        %1188 = vmatpush1.bf16.msra.mxu0 0
        %1189 = vmatprep.subr.bf16.mxu0 0
        %1190 = vmatpush1.bf16.msra.mxu0 0
        %1191 = vmatprep.subr.bf16.mxu0 0
        %1192 = vmatpush1.bf16.msra.mxu0 0
        %1193 = vmatprep.subr.bf16.mxu0 0
        %1194 = vmatpush1.bf16.msra.mxu0 0
        %1195 = vmatprep.subr.bf16.mxu0 0
        %1196 = vmatpush1.bf16.msra.mxu0 0
        %1197 = vmatprep.subr.bf16.mxu0 0
        %1198 = vmatpush1.bf16.msra.mxu0 0
        %1199 = vmatprep.mubr.bf16.mxu0 0
        %1200 = vmatmul.mubr.bf16.gmra.mrb[0].mxu0 %v1124
        %v1201 = vpop.f32.mrb[0].mxu0
        %v1202 = vadd.f32 %v1161, %v1201
        %v1203 = vpop.f32.mrb[0].mxu0
        %v1204 = vpop.f32.mrb[0].mxu0
        %v1205 = vadd.f32 %v1164, %v1204
        %v1206 = vpop.f32.mrb[0].mxu0
        %1207 = vdwg.mxu0
        %v1208 = vmax.f32 %v1202, 0.0
        %v1209 = vmax.f32 %v1205, 0.0
        %1210 = vst.msk [vmem:[%s799 + $0x1] sm:$0xf] %vm800, %v1208
        %1211 = vst.msk [vmem:[%s802 - $0x3] sm:$0xf0] %vm803, %v1208
        %1212 = vst.msk [vmem:[%s805 + $0x1] sm:$0xf] %vm800, %v1209
        %1213 = vst.msk [vmem:[%s807 - $0x3] sm:$0xf0] %vm803, %v1209
        %v1214 = vld [vmem:[%s7] sm:$0xf]
        %v1215 = vld [vmem:[%s7 + $0x4] sm:$0xf]
        %v1216 = vld [vmem:[%s7 + $0x8] sm:$0xf]
        %v1217 = vld [vmem:[%s7 + $0xc] sm:$0xf]
        %v1218 = vld [vmem:[%s7 + $0x10] sm:$0xf]
        %v1219 = vld [vmem:[%s7 + $0x14] sm:$0xf]
        %v1220 = vld [vmem:[%s7 + $0x18] sm:$0xf]
        %v1221 = vld [vmem:[%s7 + $0x1c] sm:$0xf]
        %v1222 = vld [vmem:[%s7 + $0x20] sm:$0xf]
        %v1223 = vld [vmem:[%s7 + $0x24] sm:$0xf]
        %v1224 = vld [vmem:[%s7 + $0x28] sm:$0xf]
        %v1225 = vld [vmem:[%s7 + $0x2c] sm:$0xf]
        %v1226 = vld [vmem:[%s7 + $0x30] sm:$0xf]
        %v1227 = vld [vmem:[%s7 + $0x34] sm:$0xf]
        %v1228 = vld [vmem:[%s7 + $0x38] sm:$0xf]
        %v1229 = vld [vmem:[%s7 + $0x3c] sm:$0xf]
        %v1230 = vld [vmem:[%s7 + $0x40] sm:$0xf]
        %v1231 = vld [vmem:[%s7 + $0x44] sm:$0xf]
        %v1232 = vld [vmem:[%s7 + $0x48] sm:$0xf]
        %v1233 = vld [vmem:[%s7 + $0x4c] sm:$0xf]
        %v1234 = vld [vmem:[%s7 + $0x50] sm:$0xf]
        %v1235 = vld [vmem:[%s7 + $0x54] sm:$0xf]
        %v1236 = vld [vmem:[%s7 + $0x58] sm:$0xf]
        %v1237 = vld [vmem:[%s7 + $0x5c] sm:$0xf]
        %v1238 = vld [vmem:[%s7 + $0x60] sm:$0xf]
        %v1239 = vld [vmem:[%s7 + $0x64] sm:$0xf]
        %v1240 = vld [vmem:[%s7 + $0x68] sm:$0xf]
        %v1241 = vld [vmem:[%s7 + $0x6c] sm:$0xf]
        %v1242 = vld [vmem:[%s7 + $0x70] sm:$0xf]
        %v1243 = vld [vmem:[%s7 + $0x74] sm:$0xf]
        %v1244 = vld [vmem:[%s7 + $0x78] sm:$0xf]
        %v1245 = vld [vmem:[%s7 + $0x7c] sm:$0xf]
        %v1246 = vld [vmem:[%s7 + $0x80] sm:$0xf]
        %v1247 = vld [vmem:[%s7 + $0x84] sm:$0xf]
        %v1248 = vld [vmem:[%s7 + $0x88] sm:$0xf]
        %v1249 = vld [vmem:[%s7 + $0x8c] sm:$0xf]
        %v1250 = vld [vmem:[#allocation3] sm:$0xf]
        %v1251 = vld [vmem:[#allocation3 + $0x8] sm:$0xf]
        %v1252 = vld [vmem:[#allocation3 + $0x10] sm:$0xf]
        %v1253 = vld [vmem:[#allocation3 + $0x18] sm:$0xf]
        %v1258 = vcombine.low %v1250, %v1251
        %v1259 = vcombine.low %v1252, %v1253
        %1262 = vst.msk [vmem:[#allocation4] sm:$0xff] %vm857, %v1258
        %1263 = vst.msk [vmem:[#allocation4 + $0x18] sm:$0xff] %vm857, %v1259
        %v1264 = vld [vmem:[#allocation3 + $0x1] sm:$0xf]
        %v1265 = vld [vmem:[#allocation3 + $0x9] sm:$0xf]
        %v1266 = vld [vmem:[#allocation3 + $0x11] sm:$0xf]
        %v1267 = vld [vmem:[#allocation3 + $0x19] sm:$0xf]
        %v1272 = vcombine.low %v1264, %v1265
        %v1273 = vcombine.low %v1266, %v1267
        %1274 = vrot.lane.b32.xlu0 %v1272, 32
        %v1275 = vpop.permute.xlu0 %1274
        %1276 = vrot.lane.b32.xlu0 %v1273, 32
        %v1277 = vpop.permute.xlu0 %1276
        %1280 = vst.msk [vmem:[#allocation4] sm:$0xff] %vm876, %v1275
        %1281 = vst.msk [vmem:[#allocation4 + $0x18] sm:$0xff] %vm876, %v1277
        %v1282 = vld [vmem:[#allocation3 + $0x2] sm:$0xf]
        %v1283 = vld [vmem:[#allocation3 + $0xa] sm:$0xf]
        %v1284 = vld [vmem:[#allocation3 + $0x12] sm:$0xf]
        %v1285 = vld [vmem:[#allocation3 + $0x1a] sm:$0xf]
        %v1290 = vcombine.low %v1282, %v1283
        %v1291 = vcombine.low %v1284, %v1285
        %1292 = vrot.lane.b32.xlu0 %v1290, 64
        %v1293 = vpop.permute.xlu0 %1292
        %1294 = vrot.lane.b32.xlu0 %v1291, 64
        %v1295 = vpop.permute.xlu0 %1294
        %1298 = vst.msk [vmem:[#allocation4] sm:$0xff] %vm895, %v1293
        %1299 = vst.msk [vmem:[#allocation4 + $0x18] sm:$0xff] %vm895, %v1295
        %v1300 = vld [vmem:[%s799] sm:$0xf]
        %v1301 = vld [vmem:[%s799 + $0x8] sm:$0xf]
        %v1302 = vld [vmem:[%s799 + $0x10] sm:$0xf]
        %v1303 = vld [vmem:[%s799 + $0x18] sm:$0xf]
        %v1308 = vcombine.low %v1300, %v1301
        %v1309 = vcombine.low %v1302, %v1303
        %1310 = vrot.lane.b32.xlu0 %v1308, 96
        %v1311 = vpop.permute.xlu0 %1310
        %1312 = vrot.lane.b32.xlu0 %v1309, 96
        %v1313 = vpop.permute.xlu0 %1312
        %1316 = vst.msk [vmem:[#allocation4] sm:$0xff] %vm914, %v1311
        %1317 = vst.msk [vmem:[#allocation4 + $0x18] sm:$0xff] %vm914, %v1313
        %v1318 = vld [vmem:[%s799 + $0x1] sm:$0xf]
        %v1319 = vld [vmem:[%s799 + $0x9] sm:$0xf]
        %v1320 = vld [vmem:[%s799 + $0x11] sm:$0xf]
        %v1321 = vld [vmem:[%s799 + $0x19] sm:$0xf]
        %v1326 = vcombine.low %v1318, %v1319
        %v1327 = vcombine.low %v1320, %v1321
        %1330 = vst.msk [vmem:[#allocation4 + $0x8] sm:$0xff] %vm857, %v1326
        %1331 = vst.msk [vmem:[#allocation4 + $0x20] sm:$0xff] %vm857, %v1327
        %v1332 = vld [vmem:[%s799 + $0x2] sm:$0xf]
        %v1333 = vld [vmem:[%s799 + $0xa] sm:$0xf]
        %v1334 = vld [vmem:[%s799 + $0x12] sm:$0xf]
        %v1335 = vld [vmem:[%s799 + $0x1a] sm:$0xf]
        %v1340 = vcombine.low %v1332, %v1333
        %v1341 = vcombine.low %v1334, %v1335
        %1342 = vrot.lane.b32.xlu0 %v1340, 32
        %v1343 = vpop.permute.xlu0 %1342
        %1344 = vrot.lane.b32.xlu0 %v1341, 32
        %v1345 = vpop.permute.xlu0 %1344
        %1348 = vst.msk [vmem:[#allocation4 + $0x8] sm:$0xff] %vm876, %v1343
        %1349 = vst.msk [vmem:[#allocation4 + $0x20] sm:$0xff] %vm876, %v1345
        %v1350 = vld [vmem:[%s802] sm:$0xf]
        %v1351 = vld [vmem:[%s802 + $0x8] sm:$0xf]
        %v1352 = vld [vmem:[%s802 + $0x10] sm:$0xf]
        %v1353 = vld [vmem:[%s802 + $0x18] sm:$0xf]
        %v1358 = vcombine.low %v1350, %v1351
        %v1359 = vcombine.low %v1352, %v1353
        %1360 = vrot.lane.b32.xlu0 %v1358, 64
        %v1361 = vpop.permute.xlu0 %1360
        %1362 = vrot.lane.b32.xlu0 %v1359, 64
        %v1363 = vpop.permute.xlu0 %1362
        %1366 = vst.msk [vmem:[#allocation4 + $0x8] sm:$0xff] %vm895, %v1361
        %1367 = vst.msk [vmem:[#allocation4 + $0x20] sm:$0xff] %vm895, %v1363
        %v1368 = vld [vmem:[%s802 + $0x1] sm:$0xf]
        %v1369 = vld [vmem:[%s802 + $0x9] sm:$0xf]
        %v1370 = vld [vmem:[%s802 + $0x11] sm:$0xf]
        %v1371 = vld [vmem:[%s802 + $0x19] sm:$0xf]
        %v1376 = vcombine.low %v1368, %v1369
        %v1377 = vcombine.low %v1370, %v1371
        %1378 = vrot.lane.b32.xlu0 %v1376, 96
        %v1379 = vpop.permute.xlu0 %1378
        %1380 = vrot.lane.b32.xlu0 %v1377, 96
        %v1381 = vpop.permute.xlu0 %1380
        %1384 = vst.msk [vmem:[#allocation4 + $0x8] sm:$0xff] %vm914, %v1379
        %1385 = vst.msk [vmem:[#allocation4 + $0x20] sm:$0xff] %vm914, %v1381
        %v1386 = vld [vmem:[%s802 + $0x2] sm:$0xf]
        %v1387 = vld [vmem:[%s802 + $0xa] sm:$0xf]
        %v1388 = vld [vmem:[%s802 + $0x12] sm:$0xf]
        %v1389 = vld [vmem:[%s802 + $0x1a] sm:$0xf]
        %v1394 = vcombine.low %v1386, %v1387
        %v1395 = vcombine.low %v1388, %v1389
        %1398 = vst.msk [vmem:[#allocation4 + $0x10] sm:$0xff] %vm857, %v1394
        %1399 = vst.msk [vmem:[#allocation4 + $0x28] sm:$0xff] %vm857, %v1395
        %v1400 = vld [vmem:[#allocation4] sm:$0xff]
        %v1401 = vld [vmem:[#allocation4 + $0x8] sm:$0xff]
        %v1402 = vld [vmem:[#allocation4 + $0x10] sm:$0xff]
        %v1403 = vld [vmem:[#allocation4 + $0x18] sm:$0xff]
        %v1404 = vld [vmem:[#allocation4 + $0x20] sm:$0xff]
        %v1405 = vld [vmem:[#allocation4 + $0x28] sm:$0xff]
        %v1406 = vpack.c.bf16 %v1403, %v1400
        %v1407 = vpack.c.bf16 %v1404, %v1401
        %v1408 = vpack.c.bf16 %v1405, %v1402
        %v1445 = vunpack.c.l.b16 %v1214
        %v1446 = vunpack.c.l.b16 %v1215
        %v1447 = vunpack.c.l.b16 %v1216
        %v1448 = vunpack.c.l.b16 %v1217
        %v1449 = vunpack.c.l.b16 %v1218
        %v1450 = vunpack.c.l.b16 %v1219
        %v1451 = vunpack.c.l.b16 %v1220
        %v1452 = vunpack.c.l.b16 %v1221
        %v1453 = vunpack.c.l.b16 %v1222
        %v1454 = vunpack.c.l.b16 %v1223
        %v1455 = vunpack.c.l.b16 %v1224
        %v1456 = vunpack.c.l.b16 %v1225
        %v1457 = vunpack.c.l.b16 %v1226
        %v1458 = vunpack.c.l.b16 %v1227
        %v1459 = vunpack.c.l.b16 %v1228
        %v1460 = vunpack.c.l.b16 %v1229
        %v1461 = vunpack.c.l.b16 %v1230
        %v1462 = vunpack.c.l.b16 %v1231
        %v1463 = vunpack.c.l.b16 %v1232
        %v1464 = vunpack.c.l.b16 %v1233
        %v1465 = vunpack.c.l.b16 %v1234
        %v1466 = vunpack.c.l.b16 %v1235
        %v1467 = vunpack.c.l.b16 %v1236
        %v1468 = vunpack.c.l.b16 %v1237
        %v1469 = vunpack.c.l.b16 %v1238
        %v1470 = vunpack.c.l.b16 %v1239
        %v1471 = vunpack.c.l.b16 %v1240
        %v1472 = vunpack.c.l.b16 %v1241
        %v1473 = vunpack.c.l.b16 %v1242
        %v1474 = vunpack.c.l.b16 %v1243
        %v1475 = vunpack.c.l.b16 %v1244
        %v1476 = vunpack.c.l.b16 %v1245
        %v1477 = vunpack.c.l.b16 %v1246
        %v1478 = vunpack.c.l.b16 %v1247
        %v1479 = vunpack.c.l.b16 %v1248
        %v1480 = vunpack.c.l.b16 %v1249
        %v1481 = vpack.c.b16 %v1446, %v1445
        %v1482 = vpack.c.b16 %v1448, %v1447
        %v1483 = vpack.c.b16 %v1450, %v1449
        %v1484 = vpack.c.b16 %v1452, %v1451
        %v1485 = vpack.c.b16 %v1454, %v1453
        %v1486 = vpack.c.b16 %v1456, %v1455
        %v1487 = vpack.c.b16 %v1458, %v1457
        %v1488 = vpack.c.b16 %v1460, %v1459
        %v1489 = vpack.c.b16 %v1462, %v1461
        %v1490 = vpack.c.b16 %v1464, %v1463
        %v1491 = vpack.c.b16 %v1466, %v1465
        %v1492 = vpack.c.b16 %v1468, %v1467
        %v1493 = vpack.c.b16 %v1470, %v1469
        %v1494 = vpack.c.b16 %v1472, %v1471
        %v1495 = vpack.c.b16 %v1474, %v1473
        %v1496 = vpack.c.b16 %v1476, %v1475
        %v1497 = vpack.c.b16 %v1478, %v1477
        %v1498 = vpack.c.b16 %v1480, %v1479
        %v1518 = vsel %vm857, %v1408, 0
        %1520 = vmatprep.subr.bf16.mxu0 0
        %1521 = vmatpush1.bf16.msra.mxu0 %v1481
        %1522 = vmatprep.subr.bf16.mxu0 0
        %1523 = vmatpush1.bf16.msra.mxu0 %v1482
        %1524 = vmatprep.subr.bf16.mxu0 0
        %1525 = vmatpush1.bf16.msra.mxu0 %v1483
        %1526 = vmatprep.subr.bf16.mxu0 0
        %1527 = vmatpush1.bf16.msra.mxu0 %v1484
        %1528 = vmatprep.subr.bf16.mxu0 0
        %1529 = vmatpush1.bf16.msra.mxu0 %v1485
        %1530 = vmatprep.subr.bf16.mxu0 0
        %1531 = vmatpush1.bf16.msra.mxu0 %v1486
        %1532 = vmatprep.subr.bf16.mxu0 0
        %1533 = vmatpush1.bf16.msra.mxu0 %v1487
        %1534 = vmatprep.subr.bf16.mxu0 0
        %1535 = vmatpush1.bf16.msra.mxu0 %v1488
        %1536 = vmatprep.subr.bf16.mxu0 0
        %1537 = vmatpush1.bf16.msra.mxu0 %v1489
        %1538 = vmatprep.subr.bf16.mxu0 0
        %1539 = vmatpush1.bf16.msra.mxu0 %v1490
        %1540 = vmatprep.subr.bf16.mxu0 0
        %1541 = vmatpush1.bf16.msra.mxu0 %v1491
        %1542 = vmatprep.subr.bf16.mxu0 0
        %1543 = vmatpush1.bf16.msra.mxu0 %v1492
        %1544 = vmatprep.subr.bf16.mxu0 0
        %1545 = vmatpush1.bf16.msra.mxu0 %v1493
        %1546 = vmatprep.subr.bf16.mxu0 0
        %1547 = vmatpush1.bf16.msra.mxu0 %v1494
        %1548 = vmatprep.subr.bf16.mxu0 0
        %1549 = vmatpush1.bf16.msra.mxu0 %v1495
        %1550 = vmatprep.subr.bf16.mxu0 0
        %1551 = vmatpush1.bf16.msra.mxu0 %v1496
        %1552 = vmatprep.mubr.bf16.mxu0 %v1407
        %1553 = vmatmul.mubr.bf16.gmra.mrb[0].mxu0 %v1406
        %v1554 = vpop.f32.mrb[0].mxu0
        %v1555 = vadd.f32 0.0, %v1554
        %v1556 = vpop.f32.mrb[0].mxu0
        %v1557 = vpop.f32.mrb[0].mxu0
        %v1558 = vadd.f32 0.0, %v1557
        %v1559 = vpop.f32.mrb[0].mxu0
        %1560 = vdwg.mxu0
        %1561 = vmatprep.subr.bf16.mxu0 0
        %1562 = vmatpush1.bf16.msra.mxu0 %v1497
        %1563 = vmatprep.subr.bf16.mxu0 0
        %1564 = vmatpush1.bf16.msra.mxu0 %v1498
        %1565 = vmatprep.subr.bf16.mxu0 0
        %1566 = vmatpush1.bf16.msra.mxu0 0
        %1567 = vmatprep.subr.bf16.mxu0 0
        %1568 = vmatpush1.bf16.msra.mxu0 0
        %1569 = vmatprep.subr.bf16.mxu0 0
        %1570 = vmatpush1.bf16.msra.mxu0 0
        %1571 = vmatprep.subr.bf16.mxu0 0
        %1572 = vmatpush1.bf16.msra.mxu0 0
        %1573 = vmatprep.subr.bf16.mxu0 0
        %1574 = vmatpush1.bf16.msra.mxu0 0
        %1575 = vmatprep.subr.bf16.mxu0 0
        %1576 = vmatpush1.bf16.msra.mxu0 0
        %1577 = vmatprep.subr.bf16.mxu0 0
        %1578 = vmatpush1.bf16.msra.mxu0 0
        %1579 = vmatprep.subr.bf16.mxu0 0
        %1580 = vmatpush1.bf16.msra.mxu0 0
        %1581 = vmatprep.subr.bf16.mxu0 0
        %1582 = vmatpush1.bf16.msra.mxu0 0
        %1583 = vmatprep.subr.bf16.mxu0 0
        %1584 = vmatpush1.bf16.msra.mxu0 0
        %1585 = vmatprep.subr.bf16.mxu0 0
        %1586 = vmatpush1.bf16.msra.mxu0 0
        %1587 = vmatprep.subr.bf16.mxu0 0
        %1588 = vmatpush1.bf16.msra.mxu0 0
        %1589 = vmatprep.subr.bf16.mxu0 0
        %1590 = vmatpush1.bf16.msra.mxu0 0
        %1591 = vmatprep.subr.bf16.mxu0 0
        %1592 = vmatpush1.bf16.msra.mxu0 0
        %1593 = vmatprep.mubr.bf16.mxu0 0
        %1594 = vmatmul.mubr.bf16.gmra.mrb[0].mxu0 %v1518
        %v1595 = vpop.f32.mrb[0].mxu0
        %v1596 = vadd.f32 %v1555, %v1595
        %v1597 = vpop.f32.mrb[0].mxu0
        %v1598 = vpop.f32.mrb[0].mxu0
        %v1599 = vadd.f32 %v1558, %v1598
        %v1600 = vpop.f32.mrb[0].mxu0
        %1601 = vdwg.mxu0
        %v1602 = vmax.f32 %v1596, 0.0
        %v1603 = vmax.f32 %v1599, 0.0
        %v1604 = vpack.c.bf16 %v1603, %v1602
        %v1605 = vld [vmem:[%s8] sm:$0xf]
        %vm1606 = vcmask 64512
        %v1608 = vsel %vm1606, %v1604, 0
        %vm1610 = vcmask 1043456
        %v1612 = vsel %vm1610, %v1605, 0
        %1614 = vmatprep.subr.bf16.mxu0 0
        %1615 = vmatpush1.bf16.msra.mxu0 %v1612
        %1616 = vmatprep.subr.bf16.mxu0 0
        %1617 = vmatpush1.bf16.msra.mxu0 0
        %1618 = vmatprep.subr.bf16.mxu0 0
        %1619 = vmatpush1.bf16.msra.mxu0 0
        %1620 = vmatprep.subr.bf16.mxu0 0
        %1621 = vmatpush1.bf16.msra.mxu0 0
        %1622 = vmatprep.subr.bf16.mxu0 0
        %1623 = vmatpush1.bf16.msra.mxu0 0
        %1624 = vmatprep.subr.bf16.mxu0 0
        %1625 = vmatpush1.bf16.msra.mxu0 0
        %1626 = vmatprep.subr.bf16.mxu0 0
        %1627 = vmatpush1.bf16.msra.mxu0 0
        %1628 = vmatprep.subr.bf16.mxu0 0
        %1629 = vmatpush1.bf16.msra.mxu0 0
        %1630 = vmatprep.subr.bf16.mxu0 0
        %1631 = vmatpush1.bf16.msra.mxu0 0
        %1632 = vmatprep.subr.bf16.mxu0 0
        %1633 = vmatpush1.bf16.msra.mxu0 0
        %1634 = vmatprep.subr.bf16.mxu0 0
        %1635 = vmatpush1.bf16.msra.mxu0 0
        %1636 = vmatprep.subr.bf16.mxu0 0
        %1637 = vmatpush1.bf16.msra.mxu0 0
        %1638 = vmatprep.subr.bf16.mxu0 0
        %1639 = vmatpush1.bf16.msra.mxu0 0
        %1640 = vmatprep.subr.bf16.mxu0 0
        %1641 = vmatpush1.bf16.msra.mxu0 0
        %1642 = vmatprep.subr.bf16.mxu0 0
        %1643 = vmatpush1.bf16.msra.mxu0 0
        %1644 = vmatprep.subr.bf16.mxu0 0
        %1645 = vmatpush1.bf16.msra.mxu0 0
        %1646 = vmatprep.mubr.bf16.mxu0 0
        %1647 = vmatmul.mubr.bf16.gmra.mrb[0].mxu0 %v1608
        %v1648 = vpop.f32.mrb[0].mxu0
        %v1649 = vadd.f32 0.0, %v1648
        %v1650 = vpop.f32.mrb[0].mxu0
        %v1651 = vpop.f32.mrb[0].mxu0
        %v1652 = vadd.f32 0.0, %v1651
        %v1653 = vpop.f32.mrb[0].mxu0
        %1654 = vdwg.mxu0
        %v1655 = vadd.f32 %v1202, %v1649
        %v1656 = vadd.f32 %v1205, %v1652
        %v1657 = vmax.f32 %v1655, 0.0
        %v1658 = vmax.f32 %v1656, 0.0
        %1659 = vst.msk [vmem:[%s799 + $0x1] sm:$0xf] %vm800, %v1657
        %1660 = vst.msk [vmem:[%s802 - $0x3] sm:$0xf0] %vm803, %v1657
        %1661 = vst.msk [vmem:[%s805 + $0x1] sm:$0xf] %vm800, %v1658
        %1662 = vst.msk [vmem:[%s807 - $0x3] sm:$0xf0] %vm803, %v1658
        %s1663 = scalar_lea.vmem %s7, 144
        %v1664 = vld [vmem:[%s1663] sm:$0xf]
        %v1665 = vld [vmem:[%s1663 + $0x4] sm:$0xf]
        %v1666 = vld [vmem:[%s1663 + $0x8] sm:$0xf]
        %v1667 = vld [vmem:[%s1663 + $0xc] sm:$0xf]
        %v1668 = vld [vmem:[%s1663 + $0x10] sm:$0xf]
        %v1669 = vld [vmem:[%s1663 + $0x14] sm:$0xf]
        %v1670 = vld [vmem:[%s1663 + $0x18] sm:$0xf]
        %v1671 = vld [vmem:[%s1663 + $0x1c] sm:$0xf]
        %v1672 = vld [vmem:[%s1663 + $0x20] sm:$0xf]
        %v1673 = vld [vmem:[%s1663 + $0x24] sm:$0xf]
        %v1674 = vld [vmem:[%s1663 + $0x28] sm:$0xf]
        %v1675 = vld [vmem:[%s1663 + $0x2c] sm:$0xf]
        %v1676 = vld [vmem:[%s1663 + $0x30] sm:$0xf]
        %v1677 = vld [vmem:[%s1663 + $0x34] sm:$0xf]
        %v1678 = vld [vmem:[%s1663 + $0x38] sm:$0xf]
        %v1679 = vld [vmem:[%s1663 + $0x3c] sm:$0xf]
        %v1680 = vld [vmem:[%s1663 + $0x40] sm:$0xf]
        %v1681 = vld [vmem:[%s1663 + $0x44] sm:$0xf]
        %v1682 = vld [vmem:[%s1663 + $0x48] sm:$0xf]
        %v1683 = vld [vmem:[%s1663 + $0x4c] sm:$0xf]
        %v1684 = vld [vmem:[%s1663 + $0x50] sm:$0xf]
        %v1685 = vld [vmem:[%s1663 + $0x54] sm:$0xf]
        %v1686 = vld [vmem:[%s1663 + $0x58] sm:$0xf]
        %v1687 = vld [vmem:[%s1663 + $0x5c] sm:$0xf]
        %v1688 = vld [vmem:[%s1663 + $0x60] sm:$0xf]
        %v1689 = vld [vmem:[%s1663 + $0x64] sm:$0xf]
        %v1690 = vld [vmem:[%s1663 + $0x68] sm:$0xf]
        %v1691 = vld [vmem:[%s1663 + $0x6c] sm:$0xf]
        %v1692 = vld [vmem:[%s1663 + $0x70] sm:$0xf]
        %v1693 = vld [vmem:[%s1663 + $0x74] sm:$0xf]
        %v1694 = vld [vmem:[%s1663 + $0x78] sm:$0xf]
        %v1695 = vld [vmem:[%s1663 + $0x7c] sm:$0xf]
        %v1696 = vld [vmem:[%s1663 + $0x80] sm:$0xf]
        %v1697 = vld [vmem:[%s1663 + $0x84] sm:$0xf]
        %v1698 = vld [vmem:[%s1663 + $0x88] sm:$0xf]
        %v1699 = vld [vmem:[%s1663 + $0x8c] sm:$0xf]
        %v1700 = vld [vmem:[#allocation3] sm:$0xf]
        %v1701 = vld [vmem:[#allocation3 + $0x8] sm:$0xf]
        %v1702 = vld [vmem:[#allocation3 + $0x10] sm:$0xf]
        %v1703 = vld [vmem:[#allocation3 + $0x18] sm:$0xf]
        %v1708 = vcombine.low %v1700, %v1701
        %v1709 = vcombine.low %v1702, %v1703
        %1712 = vst.msk [vmem:[#allocation4] sm:$0xff] %vm857, %v1708
        %1713 = vst.msk [vmem:[#allocation4 + $0x18] sm:$0xff] %vm857, %v1709
        %v1714 = vld [vmem:[#allocation3 + $0x1] sm:$0xf]
        %v1715 = vld [vmem:[#allocation3 + $0x9] sm:$0xf]
        %v1716 = vld [vmem:[#allocation3 + $0x11] sm:$0xf]
        %v1717 = vld [vmem:[#allocation3 + $0x19] sm:$0xf]
        %v1722 = vcombine.low %v1714, %v1715
        %v1723 = vcombine.low %v1716, %v1717
        %1724 = vrot.lane.b32.xlu0 %v1722, 32
        %v1725 = vpop.permute.xlu0 %1724
        %1726 = vrot.lane.b32.xlu0 %v1723, 32
        %v1727 = vpop.permute.xlu0 %1726
        %1730 = vst.msk [vmem:[#allocation4] sm:$0xff] %vm876, %v1725
        %1731 = vst.msk [vmem:[#allocation4 + $0x18] sm:$0xff] %vm876, %v1727
        %v1732 = vld [vmem:[#allocation3 + $0x2] sm:$0xf]
        %v1733 = vld [vmem:[#allocation3 + $0xa] sm:$0xf]
        %v1734 = vld [vmem:[#allocation3 + $0x12] sm:$0xf]
        %v1735 = vld [vmem:[#allocation3 + $0x1a] sm:$0xf]
        %v1740 = vcombine.low %v1732, %v1733
        %v1741 = vcombine.low %v1734, %v1735
        %1742 = vrot.lane.b32.xlu0 %v1740, 64
        %v1743 = vpop.permute.xlu0 %1742
        %1744 = vrot.lane.b32.xlu0 %v1741, 64
        %v1745 = vpop.permute.xlu0 %1744
        %1748 = vst.msk [vmem:[#allocation4] sm:$0xff] %vm895, %v1743
        %1749 = vst.msk [vmem:[#allocation4 + $0x18] sm:$0xff] %vm895, %v1745
        %v1750 = vld [vmem:[%s799] sm:$0xf]
        %v1751 = vld [vmem:[%s799 + $0x8] sm:$0xf]
        %v1752 = vld [vmem:[%s799 + $0x10] sm:$0xf]
        %v1753 = vld [vmem:[%s799 + $0x18] sm:$0xf]
        %v1758 = vcombine.low %v1750, %v1751
        %v1759 = vcombine.low %v1752, %v1753
        %1760 = vrot.lane.b32.xlu0 %v1758, 96
        %v1761 = vpop.permute.xlu0 %1760
        %1762 = vrot.lane.b32.xlu0 %v1759, 96
        %v1763 = vpop.permute.xlu0 %1762
        %1766 = vst.msk [vmem:[#allocation4] sm:$0xff] %vm914, %v1761
        %1767 = vst.msk [vmem:[#allocation4 + $0x18] sm:$0xff] %vm914, %v1763
        %v1768 = vld [vmem:[%s799 + $0x1] sm:$0xf]
        %v1769 = vld [vmem:[%s799 + $0x9] sm:$0xf]
        %v1770 = vld [vmem:[%s799 + $0x11] sm:$0xf]
        %v1771 = vld [vmem:[%s799 + $0x19] sm:$0xf]
        %v1776 = vcombine.low %v1768, %v1769
        %v1777 = vcombine.low %v1770, %v1771
        %1780 = vst.msk [vmem:[#allocation4 + $0x8] sm:$0xff] %vm857, %v1776
        %1781 = vst.msk [vmem:[#allocation4 + $0x20] sm:$0xff] %vm857, %v1777
        %v1782 = vld [vmem:[%s799 + $0x2] sm:$0xf]
        %v1783 = vld [vmem:[%s799 + $0xa] sm:$0xf]
        %v1784 = vld [vmem:[%s799 + $0x12] sm:$0xf]
        %v1785 = vld [vmem:[%s799 + $0x1a] sm:$0xf]
        %v1790 = vcombine.low %v1782, %v1783
        %v1791 = vcombine.low %v1784, %v1785
        %1792 = vrot.lane.b32.xlu0 %v1790, 32
        %v1793 = vpop.permute.xlu0 %1792
        %1794 = vrot.lane.b32.xlu0 %v1791, 32
        %v1795 = vpop.permute.xlu0 %1794
        %1798 = vst.msk [vmem:[#allocation4 + $0x8] sm:$0xff] %vm876, %v1793
        %1799 = vst.msk [vmem:[#allocation4 + $0x20] sm:$0xff] %vm876, %v1795
        %v1800 = vld [vmem:[%s802] sm:$0xf]
        %v1801 = vld [vmem:[%s802 + $0x8] sm:$0xf]
        %v1802 = vld [vmem:[%s802 + $0x10] sm:$0xf]
        %v1803 = vld [vmem:[%s802 + $0x18] sm:$0xf]
        %v1808 = vcombine.low %v1800, %v1801
        %v1809 = vcombine.low %v1802, %v1803
        %1810 = vrot.lane.b32.xlu0 %v1808, 64
        %v1811 = vpop.permute.xlu0 %1810
        %1812 = vrot.lane.b32.xlu0 %v1809, 64
        %v1813 = vpop.permute.xlu0 %1812
        %1816 = vst.msk [vmem:[#allocation4 + $0x8] sm:$0xff] %vm895, %v1811
        %1817 = vst.msk [vmem:[#allocation4 + $0x20] sm:$0xff] %vm895, %v1813
        %v1818 = vld [vmem:[%s802 + $0x1] sm:$0xf]
        %v1819 = vld [vmem:[%s802 + $0x9] sm:$0xf]
        %v1820 = vld [vmem:[%s802 + $0x11] sm:$0xf]
        %v1821 = vld [vmem:[%s802 + $0x19] sm:$0xf]
        %v1826 = vcombine.low %v1818, %v1819
        %v1827 = vcombine.low %v1820, %v1821
        %1828 = vrot.lane.b32.xlu0 %v1826, 96
        %v1829 = vpop.permute.xlu0 %1828
        %1830 = vrot.lane.b32.xlu0 %v1827, 96
        %v1831 = vpop.permute.xlu0 %1830
        %1834 = vst.msk [vmem:[#allocation4 + $0x8] sm:$0xff] %vm914, %v1829
        %1835 = vst.msk [vmem:[#allocation4 + $0x20] sm:$0xff] %vm914, %v1831
        %v1836 = vld [vmem:[%s802 + $0x2] sm:$0xf]
        %v1837 = vld [vmem:[%s802 + $0xa] sm:$0xf]
        %v1838 = vld [vmem:[%s802 + $0x12] sm:$0xf]
        %v1839 = vld [vmem:[%s802 + $0x1a] sm:$0xf]
        %v1844 = vcombine.low %v1836, %v1837
        %v1845 = vcombine.low %v1838, %v1839
        %1848 = vst.msk [vmem:[#allocation4 + $0x10] sm:$0xff] %vm857, %v1844
        %1849 = vst.msk [vmem:[#allocation4 + $0x28] sm:$0xff] %vm857, %v1845
        %v1850 = vld [vmem:[#allocation4] sm:$0xff]
        %v1851 = vld [vmem:[#allocation4 + $0x8] sm:$0xff]
        %v1852 = vld [vmem:[#allocation4 + $0x10] sm:$0xff]
        %v1853 = vld [vmem:[#allocation4 + $0x18] sm:$0xff]
        %v1854 = vld [vmem:[#allocation4 + $0x20] sm:$0xff]
        %v1855 = vld [vmem:[#allocation4 + $0x28] sm:$0xff]
        %v1856 = vpack.c.bf16 %v1853, %v1850
        %v1857 = vpack.c.bf16 %v1854, %v1851
        %v1858 = vpack.c.bf16 %v1855, %v1852
        %v1895 = vunpack.c.l.b16 %v1664
        %v1896 = vunpack.c.l.b16 %v1665
        %v1897 = vunpack.c.l.b16 %v1666
        %v1898 = vunpack.c.l.b16 %v1667
        %v1899 = vunpack.c.l.b16 %v1668
        %v1900 = vunpack.c.l.b16 %v1669
        %v1901 = vunpack.c.l.b16 %v1670
        %v1902 = vunpack.c.l.b16 %v1671
        %v1903 = vunpack.c.l.b16 %v1672
        %v1904 = vunpack.c.l.b16 %v1673
        %v1905 = vunpack.c.l.b16 %v1674
        %v1906 = vunpack.c.l.b16 %v1675
        %v1907 = vunpack.c.l.b16 %v1676
        %v1908 = vunpack.c.l.b16 %v1677
        %v1909 = vunpack.c.l.b16 %v1678
        %v1910 = vunpack.c.l.b16 %v1679
        %v1911 = vunpack.c.l.b16 %v1680
        %v1912 = vunpack.c.l.b16 %v1681
        %v1913 = vunpack.c.l.b16 %v1682
        %v1914 = vunpack.c.l.b16 %v1683
        %v1915 = vunpack.c.l.b16 %v1684
        %v1916 = vunpack.c.l.b16 %v1685
        %v1917 = vunpack.c.l.b16 %v1686
        %v1918 = vunpack.c.l.b16 %v1687
        %v1919 = vunpack.c.l.b16 %v1688
        %v1920 = vunpack.c.l.b16 %v1689
        %v1921 = vunpack.c.l.b16 %v1690
        %v1922 = vunpack.c.l.b16 %v1691
        %v1923 = vunpack.c.l.b16 %v1692
        %v1924 = vunpack.c.l.b16 %v1693
        %v1925 = vunpack.c.l.b16 %v1694
        %v1926 = vunpack.c.l.b16 %v1695
        %v1927 = vunpack.c.l.b16 %v1696
        %v1928 = vunpack.c.l.b16 %v1697
        %v1929 = vunpack.c.l.b16 %v1698
        %v1930 = vunpack.c.l.b16 %v1699
        %v1931 = vpack.c.b16 %v1896, %v1895
        %v1932 = vpack.c.b16 %v1898, %v1897
        %v1933 = vpack.c.b16 %v1900, %v1899
        %v1934 = vpack.c.b16 %v1902, %v1901
        %v1935 = vpack.c.b16 %v1904, %v1903
        %v1936 = vpack.c.b16 %v1906, %v1905
        %v1937 = vpack.c.b16 %v1908, %v1907
        %v1938 = vpack.c.b16 %v1910, %v1909
        %v1939 = vpack.c.b16 %v1912, %v1911
        %v1940 = vpack.c.b16 %v1914, %v1913
        %v1941 = vpack.c.b16 %v1916, %v1915
        %v1942 = vpack.c.b16 %v1918, %v1917
        %v1943 = vpack.c.b16 %v1920, %v1919
        %v1944 = vpack.c.b16 %v1922, %v1921
        %v1945 = vpack.c.b16 %v1924, %v1923
        %v1946 = vpack.c.b16 %v1926, %v1925
        %v1947 = vpack.c.b16 %v1928, %v1927
        %v1948 = vpack.c.b16 %v1930, %v1929
        %v1968 = vsel %vm857, %v1858, 0
        %1970 = vmatprep.subr.bf16.mxu0 0
        %1971 = vmatpush1.bf16.msra.mxu0 %v1931
        %1972 = vmatprep.subr.bf16.mxu0 0
        %1973 = vmatpush1.bf16.msra.mxu0 %v1932
        %1974 = vmatprep.subr.bf16.mxu0 0
        %1975 = vmatpush1.bf16.msra.mxu0 %v1933
        %1976 = vmatprep.subr.bf16.mxu0 0
        %1977 = vmatpush1.bf16.msra.mxu0 %v1934
        %1978 = vmatprep.subr.bf16.mxu0 0
        %1979 = vmatpush1.bf16.msra.mxu0 %v1935
        %1980 = vmatprep.subr.bf16.mxu0 0
        %1981 = vmatpush1.bf16.msra.mxu0 %v1936
        %1982 = vmatprep.subr.bf16.mxu0 0
        %1983 = vmatpush1.bf16.msra.mxu0 %v1937
        %1984 = vmatprep.subr.bf16.mxu0 0
        %1985 = vmatpush1.bf16.msra.mxu0 %v1938
        %1986 = vmatprep.subr.bf16.mxu0 0
        %1987 = vmatpush1.bf16.msra.mxu0 %v1939
        %1988 = vmatprep.subr.bf16.mxu0 0
        %1989 = vmatpush1.bf16.msra.mxu0 %v1940
        %1990 = vmatprep.subr.bf16.mxu0 0
        %1991 = vmatpush1.bf16.msra.mxu0 %v1941
        %1992 = vmatprep.subr.bf16.mxu0 0
        %1993 = vmatpush1.bf16.msra.mxu0 %v1942
        %1994 = vmatprep.subr.bf16.mxu0 0
        %1995 = vmatpush1.bf16.msra.mxu0 %v1943
        %1996 = vmatprep.subr.bf16.mxu0 0
        %1997 = vmatpush1.bf16.msra.mxu0 %v1944
        %1998 = vmatprep.subr.bf16.mxu0 0
        %1999 = vmatpush1.bf16.msra.mxu0 %v1945
        %2000 = vmatprep.subr.bf16.mxu0 0
        %2001 = vmatpush1.bf16.msra.mxu0 %v1946
        %2002 = vmatprep.mubr.bf16.mxu0 %v1857
        %2003 = vmatmul.mubr.bf16.gmra.mrb[0].mxu0 %v1856
        %v2004 = vpop.f32.mrb[0].mxu0
        %v2005 = vadd.f32 0.0, %v2004
        %v2006 = vpop.f32.mrb[0].mxu0
        %v2007 = vpop.f32.mrb[0].mxu0
        %v2008 = vadd.f32 0.0, %v2007
        %v2009 = vpop.f32.mrb[0].mxu0
        %2010 = vdwg.mxu0
        %2011 = vmatprep.subr.bf16.mxu0 0
        %2012 = vmatpush1.bf16.msra.mxu0 %v1947
        %2013 = vmatprep.subr.bf16.mxu0 0
        %2014 = vmatpush1.bf16.msra.mxu0 %v1948
        %2015 = vmatprep.subr.bf16.mxu0 0
        %2016 = vmatpush1.bf16.msra.mxu0 0
        %2017 = vmatprep.subr.bf16.mxu0 0
        %2018 = vmatpush1.bf16.msra.mxu0 0
        %2019 = vmatprep.subr.bf16.mxu0 0
        %2020 = vmatpush1.bf16.msra.mxu0 0
        %2021 = vmatprep.subr.bf16.mxu0 0
        %2022 = vmatpush1.bf16.msra.mxu0 0
        %2023 = vmatprep.subr.bf16.mxu0 0
        %2024 = vmatpush1.bf16.msra.mxu0 0
        %2025 = vmatprep.subr.bf16.mxu0 0
        %2026 = vmatpush1.bf16.msra.mxu0 0
        %2027 = vmatprep.subr.bf16.mxu0 0
        %2028 = vmatpush1.bf16.msra.mxu0 0
        %2029 = vmatprep.subr.bf16.mxu0 0
        %2030 = vmatpush1.bf16.msra.mxu0 0
        %2031 = vmatprep.subr.bf16.mxu0 0
        %2032 = vmatpush1.bf16.msra.mxu0 0
        %2033 = vmatprep.subr.bf16.mxu0 0
        %2034 = vmatpush1.bf16.msra.mxu0 0
        %2035 = vmatprep.subr.bf16.mxu0 0
        %2036 = vmatpush1.bf16.msra.mxu0 0
        %2037 = vmatprep.subr.bf16.mxu0 0
        %2038 = vmatpush1.bf16.msra.mxu0 0
        %2039 = vmatprep.subr.bf16.mxu0 0
        %2040 = vmatpush1.bf16.msra.mxu0 0
        %2041 = vmatprep.subr.bf16.mxu0 0
        %2042 = vmatpush1.bf16.msra.mxu0 0
        %2043 = vmatprep.mubr.bf16.mxu0 0
        %2044 = vmatmul.mubr.bf16.gmra.mrb[0].mxu0 %v1968
        %v2045 = vpop.f32.mrb[0].mxu0
        %v2046 = vadd.f32 %v2005, %v2045
        %v2047 = vpop.f32.mrb[0].mxu0
        %v2048 = vpop.f32.mrb[0].mxu0
        %v2049 = vadd.f32 %v2008, %v2048
        %v2050 = vpop.f32.mrb[0].mxu0
        %2051 = vdwg.mxu0
        %v2052 = vmax.f32 %v2046, 0.0
        %v2053 = vmax.f32 %v2049, 0.0
        %v2054 = vpack.c.bf16 %v2053, %v2052
        %s2055 = scalar_lea.vmem %s8, 4
        %v2056 = vld [vmem:[%s2055] sm:$0xf]
        %v2058 = vsel %vm1606, %v2054, 0
        %v2061 = vsel %vm1610, %v2056, 0
        %2063 = vmatprep.subr.bf16.mxu0 0
        %2064 = vmatpush1.bf16.msra.mxu0 %v2061
        %2065 = vmatprep.subr.bf16.mxu0 0
        %2066 = vmatpush1.bf16.msra.mxu0 0
        %2067 = vmatprep.subr.bf16.mxu0 0
        %2068 = vmatpush1.bf16.msra.mxu0 0
        %2069 = vmatprep.subr.bf16.mxu0 0
        %2070 = vmatpush1.bf16.msra.mxu0 0
        %2071 = vmatprep.subr.bf16.mxu0 0
        %2072 = vmatpush1.bf16.msra.mxu0 0
        %2073 = vmatprep.subr.bf16.mxu0 0
        %2074 = vmatpush1.bf16.msra.mxu0 0
        %2075 = vmatprep.subr.bf16.mxu0 0
        %2076 = vmatpush1.bf16.msra.mxu0 0
        %2077 = vmatprep.subr.bf16.mxu0 0
        %2078 = vmatpush1.bf16.msra.mxu0 0
        %2079 = vmatprep.subr.bf16.mxu0 0
        %2080 = vmatpush1.bf16.msra.mxu0 0
        %2081 = vmatprep.subr.bf16.mxu0 0
        %2082 = vmatpush1.bf16.msra.mxu0 0
        %2083 = vmatprep.subr.bf16.mxu0 0
        %2084 = vmatpush1.bf16.msra.mxu0 0
        %2085 = vmatprep.subr.bf16.mxu0 0
        %2086 = vmatpush1.bf16.msra.mxu0 0
        %2087 = vmatprep.subr.bf16.mxu0 0
        %2088 = vmatpush1.bf16.msra.mxu0 0
        %2089 = vmatprep.subr.bf16.mxu0 0
        %2090 = vmatpush1.bf16.msra.mxu0 0
        %2091 = vmatprep.subr.bf16.mxu0 0
        %2092 = vmatpush1.bf16.msra.mxu0 0
        %2093 = vmatprep.subr.bf16.mxu0 0
        %2094 = vmatpush1.bf16.msra.mxu0 0
        %2095 = vmatprep.mubr.bf16.mxu0 0
        %2096 = vmatmul.mubr.bf16.gmra.mrb[0].mxu0 %v2058
        %v2097 = vpop.f32.mrb[0].mxu0
        %v2098 = vadd.f32 0.0, %v2097
        %v2099 = vpop.f32.mrb[0].mxu0
        %v2100 = vpop.f32.mrb[0].mxu0
        %v2101 = vadd.f32 0.0, %v2100
        %v2102 = vpop.f32.mrb[0].mxu0
        %2103 = vdwg.mxu0
        %v2104 = vadd.f32 %v1655, %v2098
        %v2105 = vadd.f32 %v1656, %v2101
        %v2106 = vmax.f32 %v2104, 0.0
        %v2107 = vmax.f32 %v2105, 0.0
        %2108 = vst.msk [vmem:[%s325] sm:$0xff] %vm857, %v2106
        %2109 = vst.msk [vmem:[%s325 + $0x8] sm:$0xff] %vm857, %v2107
        %s2110 = sand.u32 %s225, 1
        %s2111 = scalar_lea.sflag [#allocation6], %s2110
        %s2112 = sand.u32 %s225, 1
        %s2113 = smul.addr %s2112, 16
        %s2114 = scalar_lea.vmem [#allocation5], %s2113
        // Predicated region
        $region57: #{encoder_forward.1} parent=55 // pred_check
          %p2115 = pneg %p235
        $region58: #{encoder_forward.1} parent=55 // pred_check_branch
          %2117 = sbr.rel (%p2115) target = $region60
        $region59: #{encoder_forward.1} parent=55 // pred_region
          %s2119 = ssub.s32 256, 256
          %2120 = vsyncadd %s2111, %s2119
          %s2121 = smul.addr %s23, 2
          %s2122 = smul.addr %s2121, 128
          %s2123 = scalar_lea.hbm %s9, %s2122
          %s2124 = sshll.u32 %s2114, 4
          %s2125 = int_to_ptr.vmem [resolvable:$true] %s2124
          %2130 = dma.vmem_to_hbm [thread:$0]  %s2125, 256, %s2123, %s2111, 128, 128, 8
        $region60: #{encoder_forward.1} parent=55 // pred_fallthru
          _
      $region56: #{encoder_forward.1} parent=5 // pred_fallthru
        _
      %p2131 = scmp.le.s32.totalorder 2, %s18
      // Predicated region
      $region61: #{encoder_forward.1} parent=5 // pred_check
        %p2132 = pneg %p2131
      $region62: #{encoder_forward.1} parent=5 // pred_check_branch
        %2134 = sbr.rel (%p2132) target = $region64
      $region63: #{encoder_forward.1} parent=5 // pred_region
        %s2135 = ssub.s32 %s18, 2
        // Predicated region
        $region65: #{encoder_forward.1} parent=63 // pred_check
          %p2136 = pneg %p241
        $region66: #{encoder_forward.1} parent=63 // pred_check_branch
          %2138 = sbr.rel (%p2136) target = $region68
        $region67: #{encoder_forward.1} parent=63 // pred_region
          %s2139 = sand.u32 %s226, 1
          %s2140 = scalar_lea.sflag [#allocation6], %s2139
          %s2141 = sand.u32 %s226, 1
          %s2142 = smul.addr %s2141, 16
          %s2143 = scalar_lea.vmem [#allocation5], %s2142
          %2144 = dma.done %s2140, 256
        $region68: #{encoder_forward.1} parent=63 // pred_fallthru
          _
      $region64: #{encoder_forward.1} parent=5 // pred_fallthru
        _
    $region6: #{encoder_forward.1} parent=1 // loop_footer
      %s22 = sadd.s32 1, %s18
    $region7: #{encoder_forward.1} parent=1 // loop_footer_branch
      %17 = sbr.rel target = $region3
    $region8: #{encoder_forward.1} parent=1 // loop_exit
      _
    %2145 = vsyncpa [#allocation6], 1
    %s2146 = scalar_lea.sflag [#allocation6], 1
    %2147 = vsyncpa %s2146, 1

</llo_original>
